<compile_context>
chip_gen: v7x
topology: tpu7x:2x2x1
jax: 0.10.0
libtpu: 0.0.40
codegen_flags: <defaults>
</compile_context>

<pallas_src>
import functools
import math

import jax
import jax.numpy as jnp
from jax.experimental import pallas as pl
from jax.experimental.pallas import tpu as pltpu

SCALE_FACTOR = 2.0      # stands in for the undefined global `Config.scale_factor`
LN_EPS = 1e-5           # PyTorch nn.Transformer layer_norm_eps default
FFN_CHUNK = 512         # bound on the (rows, F) f32 FFN intermediate per matmul pass
VOCAB_TILE_CAP = 1024   # fc_out vocab tile width (lanes)


# --------------------------------------------------------------------------
# In-kernel helpers (plain functions traced inside the fused layer kernels)
# --------------------------------------------------------------------------

def _ln_f32(h, g, b, eps):
    """LayerNorm over the last dim, biased variance (PyTorch semantics), f32 math."""
    mean = jnp.mean(h, axis=-1, keepdims=True)
    var = jnp.mean(jnp.square(h - mean), axis=-1, keepdims=True)
    return (h - mean) * jax.lax.rsqrt(var + eps) * g + b


def _attention(xq_bf, xkv_bf, wqkv_ref, bqkv_ref, wo_ref, bo_ref, num_heads):
    """All-head attention + output projection. Returns f32 (Tq, D).

    xkv_bf=None -> self-attention (single packed (Tq,D)@(D,3D) MXU pass).
    """
    D = xq_bf.shape[-1]
    dh = D // num_heads
    sm = 1.0 / math.sqrt(dh)

    if xkv_bf is None:
        qkv = jnp.dot(xq_bf, wqkv_ref[...], preferred_element_type=jnp.float32) + bqkv_ref[...]
        q, k, v = qkv[:, 0:D], qkv[:, D:2 * D], qkv[:, 2 * D:3 * D]
    else:
        q = jnp.dot(xq_bf, wqkv_ref[:, 0:D],
                    preferred_element_type=jnp.float32) + bqkv_ref[:, 0:D]
        kv = jnp.dot(xkv_bf, wqkv_ref[:, D:3 * D],
                     preferred_element_type=jnp.float32) + bqkv_ref[:, D:3 * D]
        k, v = kv[:, 0:D], kv[:, D:2 * D]

    # One full-width bf16 cast per tensor (hoisted out of all per-head work).
    q_bf = (q * sm).astype(jnp.bfloat16)     # 1/sqrt(dh) folded into q
    k_bf = k.astype(jnp.bfloat16)
    v_bf = v.astype(jnp.bfloat16)

    def split(t):                                        # (T, D) -> (H, T, dh)
        return jnp.stack([t[:, h * dh:(h + 1) * dh] for h in range(num_heads)], axis=0)

    qh, kh, vh = split(q_bf), split(k_bf), split(v_bf)

    # Head-batched score / weighted-sum matmuls (one dot_general each, all heads).
    s = jnp.einsum('hqd,hkd->hqk', qh, kh, preferred_element_type=jnp.float32)
    m = jnp.max(s, axis=-1, keepdims=True)
    p = jnp.exp(s - m)                                   # f32 softmax math (v5e-safe)
    l = jnp.sum(p, axis=-1, keepdims=True)
    o = jnp.einsum('hqk,hkd->hqd', p.astype(jnp.bfloat16), vh,
                   preferred_element_type=jnp.float32)
    o = o * pl.reciprocal(l, approx=True)                # EUP slot, not a VALU divide

    # Merge heads (lane concat) and run a single (Tq, D) @ (D, D) output projection.
    merged = jnp.concatenate([o[h] for h in range(num_heads)], axis=-1)
    return jnp.dot(merged.astype(jnp.bfloat16), wo_ref[...],
                   preferred_element_type=jnp.float32) + bo_ref[...]


def _ffn(x_bf, w1_ref, b1_ref, w2_ref, b2_ref, chunk):
    """relu-FFN with the (rows, F) f32 hidden slab bounded to `chunk` lanes per pass."""
    F = w1_ref.shape[1]
    acc = None
    for f0 in range(0, F, chunk):
        f1 = min(f0 + chunk, F)
        h = jnp.dot(x_bf, w1_ref[:, f0:f1],
                    preferred_element_type=jnp.float32) + b1_ref[:, f0:f1]
        h = jnp.maximum(h, 0.0).astype(jnp.bfloat16)
        part = jnp.dot(h, w2_ref[f0:f1, :], preferred_element_type=jnp.float32)
        acc = part if acc is None else acc + part
    return acc + b2_ref[...]


# --------------------------------------------------------------------------
# Kernel 1: fused ENCODER layer  (self-attn + LN1 + FFN + LN2 [+ final LN])
# --------------------------------------------------------------------------

def _enc_layer_kernel(x_ref, wqkv_ref, bqkv_ref, wo_ref, bo_ref,
                      ln1g_ref, ln1b_ref,
                      w1_ref, b1_ref, w2_ref, b2_ref,
                      ln2g_ref, ln2b_ref, *rest,
                      num_heads, eps, ffn_chunk, final_ln):
    if final_ln:
        fg_ref, fb_ref, o_ref = rest
    else:
        (o_ref,) = rest

    x = x_ref[0]                                         # (T, D)
    x_f = x.astype(jnp.float32)
    x_bf = x.astype(jnp.bfloat16)

    attn = _attention(x_bf, None, wqkv_ref, bqkv_ref, wo_ref, bo_ref, num_heads)
    h1 = _ln_f32(attn + x_f, ln1g_ref[...], ln1b_ref[...], eps)

    ff = _ffn(h1.astype(jnp.bfloat16), w1_ref, b1_ref, w2_ref, b2_ref, ffn_chunk)
    y = _ln_f32(ff + h1, ln2g_ref[...], ln2b_ref[...], eps)
    if final_ln:
        y = _ln_f32(y, fg_ref[...], fb_ref[...], eps)    # encoder-stack final norm (fused)
    o_ref[0] = y.astype(o_ref.dtype)


# --------------------------------------------------------------------------
# Kernel 2: fused DECODER layer
#   (self-attn + LN1 + cross-attn + LN2 + FFN + LN3 [+ final LN]);
#   `memory * scale_factor` and the f32->bf16 cast folded in for layer 0.
# --------------------------------------------------------------------------

def _dec_layer_kernel(y_ref, mem_ref,
                      s_wqkv_ref, s_bqkv_ref, s_wo_ref, s_bo_ref, ln1g_ref, ln1b_ref,
                      c_wqkv_ref, c_bqkv_ref, c_wo_ref, c_bo_ref, ln2g_ref, ln2b_ref,
                      w1_ref, b1_ref, w2_ref, b2_ref, ln3g_ref, ln3b_ref, *rest,
                      num_heads, eps, ffn_chunk, in_scale, final_ln):
    if final_ln:
        fg_ref, fb_ref, o_ref = rest
    else:
        (o_ref,) = rest

    y_in = y_ref[0].astype(jnp.float32)                  # (S, D) f32 (handles f32 or bf16 input)
    if in_scale != 1.0:
        y_in = y_in * in_scale                           # fold memory * scale_factor
    y_bf = y_in.astype(jnp.bfloat16)

    sa = _attention(y_bf, None, s_wqkv_ref, s_bqkv_ref, s_wo_ref, s_bo_ref, num_heads)
    h1 = _ln_f32(sa + y_in, ln1g_ref[...], ln1b_ref[...], eps)

    mem = mem_ref[0]                                     # (Tm, D) bf16 (encoder output)
    ca = _attention(h1.astype(jnp.bfloat16), mem,
                    c_wqkv_ref, c_bqkv_ref, c_wo_ref, c_bo_ref, num_heads)
    h2 = _ln_f32(ca + h1, ln2g_ref[...], ln2b_ref[...], eps)

    ff = _ffn(h2.astype(jnp.bfloat16), w1_ref, b1_ref, w2_ref, b2_ref, ffn_chunk)
    out = _ln_f32(ff + h2, ln3g_ref[...], ln3b_ref[...], eps)
    if final_ln:
        out = _ln_f32(out, fg_ref[...], fb_ref[...], eps)  # decoder-stack final norm (fused)
    o_ref[0] = out.astype(o_ref.dtype)


# --------------------------------------------------------------------------
# Kernel 3: fc_out + cap_lens masking, vocab-tiled (lane-dense padded vocab)
# --------------------------------------------------------------------------

def _fc_mask_kernel(cap_ref, y_ref, w_ref, b_ref, o_ref, *, t_out):
    length = cap_ref[pl.program_id(0)]
    y = y_ref[0][:t_out, :]                              # (Tc, D) bf16
    logits = jnp.dot(y, w_ref[...], preferred_element_type=jnp.float32) + b_ref[...]
    t_idx = jax.lax.broadcasted_iota(jnp.int32, logits.shape, 0)
    o_ref[0] = jnp.where(t_idx < length, logits, 0.0).astype(o_ref.dtype)


# --------------------------------------------------------------------------
# pallas_call wrappers
# --------------------------------------------------------------------------

def _bytes(a):
    return int(a.size) * a.dtype.itemsize


def _full_spec(a):
    zeros = (0,) * a.ndim
    return pl.BlockSpec(a.shape, lambda *args, _z=zeros: _z)


def _vmem_limit(block_bytes):
    # double-buffered pipeline + f32 working-set headroom; clamp under v7x's 64 MiB physical
    return int(min(48 * 1024 * 1024, max(8 * 1024 * 1024, 3 * block_bytes)))


def encoder_layer(x, lp, num_heads, final_g=None, final_b=None):
    B, T, D = x.shape
    final_ln = final_g is not None
    sa, ffn = lp["self_attn"], lp["ffn"]
    inputs = [x, sa["wqkv"], sa["bqkv"], sa["wo"], sa["bo"],
              lp["ln1_g"], lp["ln1_b"],
              ffn["w1"], ffn["b1"], ffn["w2"], ffn["b2"],
              lp["ln2_g"], lp["ln2_b"]]
    if final_ln:
        inputs += [final_g, final_b]
    in_specs = [pl.BlockSpec((1, T, D), lambda i: (i, 0, 0))] + \
               [_full_spec(a) for a in inputs[1:]]
    blk_bytes = 2 * T * D * x.dtype.itemsize + sum(_bytes(a) for a in inputs[1:])
    kern = functools.partial(_enc_layer_kernel, num_heads=num_heads, eps=LN_EPS,
                             ffn_chunk=FFN_CHUNK, final_ln=final_ln)
    return pl.pallas_call(
        kern,
        out_shape=jax.ShapeDtypeStruct((B, T, D), jnp.bfloat16),
        grid=(B,),
        in_specs=in_specs,
        out_specs=pl.BlockSpec((1, T, D), lambda i: (i, 0, 0)),
        compiler_params=pltpu.CompilerParams(
            dimension_semantics=("parallel",),
            vmem_limit_bytes=_vmem_limit(blk_bytes)),
    )(*inputs)


def decoder_layer(y, mem, lp, num_heads, in_scale=1.0, final_g=None, final_b=None):
    B, S, D = y.shape
    Tm = mem.shape[1]
    final_ln = final_g is not None
    sa, ca, ffn = lp["self_attn"], lp["cross_attn"], lp["ffn"]
    inputs = [y, mem,
              sa["wqkv"], sa["bqkv"], sa["wo"], sa["bo"], lp["ln1_g"], lp["ln1_b"],
              ca["wqkv"], ca["bqkv"], ca["wo"], ca["bo"], lp["ln2_g"], lp["ln2_b"],
              ffn["w1"], ffn["b1"], ffn["w2"], ffn["b2"], lp["ln3_g"], lp["ln3_b"]]
    if final_ln:
        inputs += [final_g, final_b]
    in_specs = [pl.BlockSpec((1, S, D), lambda i: (i, 0, 0)),
                pl.BlockSpec((1, Tm, D), lambda i: (i, 0, 0))] + \
               [_full_spec(a) for a in inputs[2:]]
    blk_bytes = (2 * S * D * 4 + Tm * D * 2) + sum(_bytes(a) for a in inputs[2:])
    kern = functools.partial(_dec_layer_kernel, num_heads=num_heads, eps=LN_EPS,
                             ffn_chunk=FFN_CHUNK, in_scale=float(in_scale),
                             final_ln=final_ln)
    return pl.pallas_call(
        kern,
        out_shape=jax.ShapeDtypeStruct((B, S, D), jnp.bfloat16),
        grid=(B,),
        in_specs=in_specs,
        out_specs=pl.BlockSpec((1, S, D), lambda i: (i, 0, 0)),
        compiler_params=pltpu.CompilerParams(
            dimension_semantics=("parallel",),
            vmem_limit_bytes=_vmem_limit(blk_bytes)),
    )(*inputs)


def _pick_vocab_tile(vp, cap=VOCAB_TILE_CAP):
    t = min(vp, cap)
    t -= t % 128
    while vp % t != 0:
        t -= 128
    return t


def fc_out_masked(y, w_pad, b_pad, cap_lens, vocab, max_cap):
    """y:(B,S,D) bf16, w_pad:(D,Vp) bf16 -> masked logits (B, max_cap, vocab|Vp) f32."""
    B, S, D = y.shape
    Vp = w_pad.shape[1]
    tv = _pick_vocab_tile(Vp)
    grid_spec = pltpu.PrefetchScalarGridSpec(
        num_scalar_prefetch=1,
        grid=(B, Vp // tv),
        in_specs=[pl.BlockSpec((1, S, D), lambda i, j, cl: (i, 0, 0)),
                  pl.BlockSpec((D, tv), lambda i, j, cl: (0, j)),
                  pl.BlockSpec((1, tv), lambda i, j, cl: (0, j))],
        out_specs=pl.BlockSpec((1, max_cap, tv), lambda i, j, cl: (i, 0, j)),
    )
    blk_bytes = S * D * 2 + D * tv * 2 + tv * 4 + max_cap * tv * 4
    out = pl.pallas_call(
        functools.partial(_fc_mask_kernel, t_out=max_cap),
        out_shape=jax.ShapeDtypeStruct((B, max_cap, Vp), jnp.float32),
        grid_spec=grid_spec,
        compiler_params=pltpu.CompilerParams(
            dimension_semantics=("parallel", "parallel"),
            vmem_limit_bytes=_vmem_limit(blk_bytes)),
    )(cap_lens, y, w_pad, b_pad)
    # Padded vocab columns are exactly zero; slice only when the caller needs the
    # unpadded width (skipped entirely when vocab is already a 128-multiple).
    return out if Vp == vocab else out[:, :, :vocab]


# --------------------------------------------------------------------------
# Forward (one fused pallas_call per layer + one fc_out call)
# --------------------------------------------------------------------------

def transformer_decoder_forward(params, tgt_tokens, memory, cap_lens, num_heads):
    # TODO(synk): embedding gather kept as XLA glue (jnp.take); folding it into the first
    #             encoder-layer kernel (scalar-prefetch token ids + DMA gather) is a follow-up.
    src = jnp.take(params["embedding"], tgt_tokens, axis=0).astype(jnp.bfloat16)   # (B, T, D)

    # Encoder stack; final encoder LayerNorm fused into the last layer's kernel.
    x = src
    n_enc = len(params["enc_layers"])
    for idx, lp in enumerate(params["enc_layers"]):
        last = idx == n_enc - 1
        x = encoder_layer(x, lp, num_heads,
                          params["enc_norm_g"] if last else None,
                          params["enc_norm_b"] if last else None)
    enc_out = x

    # Decoder stack: raw f32 memory fed straight to layer 0; scale_factor + bf16 cast
    # are folded into that kernel.  Final decoder LayerNorm fused into the last layer.
    y = memory
    n_dec = len(params["dec_layers"])
    for idx, lp in enumerate(params["dec_layers"]):
        last = idx == n_dec - 1
        y = decoder_layer(y, enc_out, lp, num_heads,
                          in_scale=SCALE_FACTOR if idx == 0 else 1.0,
                          final_g=params["dec_norm_g"] if last else None,
                          final_b=params["dec_norm_b"] if last else None)

    # dropout (identity in eval) -> fc_out with padded_output masking fused in.
    max_cap = int(max(cap_lens))
    cl = jnp.asarray(cap_lens, dtype=jnp.int32)
    return fc_out_masked(y, params["fc_w_pad"], params["fc_b_pad"], cl,
                         params["vocab"], max_cap)


# --------------------------------------------------------------------------
# Deterministic synthetic parameter init (pre-packed / pre-cast for the kernels)
# --------------------------------------------------------------------------

def _normal(key, shape, scale=0.02):
    return (scale * jax.random.normal(key, shape)).astype(jnp.float32)


def _init_mha(key, d):
    ks = jax.random.split(key, 4)
    wqkv = jnp.concatenate([_normal(ks[0], (d, d)), _normal(ks[1], (d, d)),
                            _normal(ks[2], (d, d))], axis=1)
    return {"wqkv": wqkv.astype(jnp.bfloat16),
            "bqkv": jnp.zeros((1, 3 * d), jnp.float32),
            "wo": _normal(ks[3], (d, d)).astype(jnp.bfloat16),
            "bo": jnp.zeros((1, d), jnp.float32)}


def _init_ln(d):
    return jnp.ones((1, d), jnp.float32), jnp.zeros((1, d), jnp.float32)


def _init_ffn(key, d, f):
    k1, k2 = jax.random.split(key)
    return {"w1": _normal(k1, (d, f)).astype(jnp.bfloat16), "b1": jnp.zeros((1, f), jnp.float32),
            "w2": _normal(k2, (f, d)).astype(jnp.bfloat16), "b2": jnp.zeros((1, d), jnp.float32)}


def _init_enc_layer(key, d, f):
    ka, kf = jax.random.split(key)
    g1, b1 = _init_ln(d)
    g2, b2 = _init_ln(d)
    return {"self_attn": _init_mha(ka, d), "ffn": _init_ffn(kf, d, f),
            "ln1_g": g1, "ln1_b": b1, "ln2_g": g2, "ln2_b": b2}


def _init_dec_layer(key, d, f):
    ka, kc, kf = jax.random.split(key, 3)
    g1, b1 = _init_ln(d)
    g2, b2 = _init_ln(d)
    g3, b3 = _init_ln(d)
    return {"self_attn": _init_mha(ka, d), "cross_attn": _init_mha(kc, d),
            "ffn": _init_ffn(kf, d, f),
            "ln1_g": g1, "ln1_b": b1, "ln2_g": g2, "ln2_b": b2, "ln3_g": g3, "ln3_b": b3}


def init_params(key, vocab_size, d_model, ffn_dim, n_enc, n_dec):
    ks = jax.random.split(key, 3 + n_enc + n_dec)
    v_pad = pl.cdiv(vocab_size, 128) * 128                  # lane-dense padded vocab
    fc_w = _normal(ks[1], (d_model, vocab_size))
    fc_w_pad = jnp.zeros((d_model, v_pad), jnp.float32).at[:, :vocab_size].set(fc_w)
    params = {
        "embedding": _normal(ks[0], (vocab_size, d_model), scale=1.0),
        "fc_w_pad": fc_w_pad.astype(jnp.bfloat16),
        "fc_b_pad": jnp.zeros((1, v_pad), jnp.float32),
        "vocab": vocab_size,
        "enc_layers": [_init_enc_layer(ks[3 + i], d_model, ffn_dim) for i in range(n_enc)],
        "dec_layers": [_init_dec_layer(ks[3 + n_enc + i], d_model, ffn_dim) for i in range(n_dec)],
    }
    params["enc_norm_g"], params["enc_norm_b"] = _init_ln(d_model)
    params["dec_norm_g"], params["dec_norm_b"] = _init_ln(d_model)
    return params


# --------------------------------------------------------------------------

if __name__ == "__main__":
    B = 2
    T_TGT = 8      # target-token sequence length (feeds the encoder in the reference forward)
    S_MEM = 8      # memory sequence length (feeds the decoder)
    D_MODEL = 128  # word_dim == num_channels (required for fc_out to type-check); lane-dense
    N_HEADS = 4
    FFN = 256      # dim_feedforward (hidden_size)
    N_ENC = 2      # small synthetic stack (PyTorch default is 6)
    N_DEC = 2      # num_decoder_layers
    VOCAB = 128    # 128-multiple -> fc_out emits unpadded logits with no extra slice

    key = jax.random.PRNGKey(0)
    k_param, k_tok, k_mem = jax.random.split(key, 3)

    params = init_params(k_param, VOCAB, D_MODEL, FFN, N_ENC, N_DEC)
    tgt_tokens = jax.random.randint(k_tok, (B, T_TGT), 0, VOCAB, dtype=jnp.int32)
    memory = jax.random.normal(k_mem, (B, S_MEM, D_MODEL), dtype=jnp.float32)
    cap_lens = [6, 4]

    out = transformer_decoder_forward(params, tgt_tokens, memory, cap_lens, N_HEADS)
    out = jax.block_until_ready(out)

    assert out.shape == (B, max(cap_lens), VOCAB), out.shape
    assert out.dtype == jnp.float32
    assert bool(jnp.all(jnp.isfinite(out)))
    # rows beyond cap_lens[i] must be exactly zero (padded_output semantics)
    assert float(jnp.abs(out[1, cap_lens[1]:, :]).max()) == 0.0
    print("KERNEL_OK")
</pallas_src>

<mosaic_0001>
module attributes {stable_mosaic.version = 11 : i64} {
  func.func @_enc_layer_kernel(%arg0: i32, %arg1: memref<1x8x128xbf16, #tpu.memory_space<vmem>>, %arg2: memref<128x384xbf16, #tpu.memory_space<vmem>>, %arg3: memref<1x384xf32, #tpu.memory_space<vmem>>, %arg4: memref<128x128xbf16, #tpu.memory_space<vmem>>, %arg5: memref<1x128xf32, #tpu.memory_space<vmem>>, %arg6: memref<1x128xf32, #tpu.memory_space<vmem>>, %arg7: memref<1x128xf32, #tpu.memory_space<vmem>>, %arg8: memref<128x256xbf16, #tpu.memory_space<vmem>>, %arg9: memref<1x256xf32, #tpu.memory_space<vmem>>, %arg10: memref<256x128xbf16, #tpu.memory_space<vmem>>, %arg11: memref<1x128xf32, #tpu.memory_space<vmem>>, %arg12: memref<1x128xf32, #tpu.memory_space<vmem>>, %arg13: memref<1x128xf32, #tpu.memory_space<vmem>>, %arg14: memref<1x8x128xbf16, #tpu.memory_space<vmem>>) attributes {dimension_semantics = [#tpu.dimension_semantics<parallel>], iteration_bounds = array<i64: 2>, scalar_prefetch = 0 : i64, scratch_operands = 0 : i64, tpu.core_type = #tpu.core_type<tc>, window_params = [{transform_indices = @transform_0, window_bounds = array<i64: 1, 8, 128>}, {pipeline_mode = #tpu.pipeline_mode<synchronous>, transform_indices = @transform_1, window_bounds = array<i64: 128, 384>}, {pipeline_mode = #tpu.pipeline_mode<synchronous>, transform_indices = @transform_2, window_bounds = array<i64: 1, 384>}, {pipeline_mode = #tpu.pipeline_mode<synchronous>, transform_indices = @transform_3, window_bounds = array<i64: 128, 128>}, {pipeline_mode = #tpu.pipeline_mode<synchronous>, transform_indices = @transform_4, window_bounds = array<i64: 1, 128>}, {pipeline_mode = #tpu.pipeline_mode<synchronous>, transform_indices = @transform_5, window_bounds = array<i64: 1, 128>}, {pipeline_mode = #tpu.pipeline_mode<synchronous>, transform_indices = @transform_6, window_bounds = array<i64: 1, 128>}, {pipeline_mode = #tpu.pipeline_mode<synchronous>, transform_indices = @transform_7, window_bounds = array<i64: 128, 256>}, {pipeline_mode = #tpu.pipeline_mode<synchronous>, transform_indices = @transform_8, window_bounds = array<i64: 1, 256>}, {pipeline_mode = #tpu.pipeline_mode<synchronous>, transform_indices = @transform_9, window_bounds = array<i64: 256, 128>}, {pipeline_mode = #tpu.pipeline_mode<synchronous>, transform_indices = @transform_10, window_bounds = array<i64: 1, 128>}, {pipeline_mode = #tpu.pipeline_mode<synchronous>, transform_indices = @transform_11, window_bounds = array<i64: 1, 128>}, {pipeline_mode = #tpu.pipeline_mode<synchronous>, transform_indices = @transform_12, window_bounds = array<i64: 1, 128>}, {transform_indices = @transform_13, window_bounds = array<i64: 1, 8, 128>}]} {
    %c0 = arith.constant 0 : index
    %c0_0 = arith.constant 0 : index
    %c0_1 = arith.constant 0 : index
    %0 = vector.load %arg1[%c0, %c0_0, %c0_1] : memref<1x8x128xbf16, #tpu.memory_space<vmem>>, vector<1x8x128xbf16>
    %1 = vector.shape_cast %0 : vector<1x8x128xbf16> to vector<8x128xbf16>
    %2 = arith.extf %1 : vector<8x128xbf16> to vector<8x128xf32>
    %c0_2 = arith.constant 0 : index
    %c0_3 = arith.constant 0 : index
    %3 = vector.load %arg2[%c0_2, %c0_3] : memref<128x384xbf16, #tpu.memory_space<vmem>>, vector<128x384xbf16>
    %cst = arith.constant dense<0.000000e+00> : vector<8x384xf32>
    %4 = tpu.matmul %1, %3, %cst {dimension_numbers = #tpu.dot_dimension_numbers<[1], [0], [0], [1], [0, 0, 1, 1], [], []>} : vector<8x128xbf16>, vector<128x384xbf16>, vector<8x384xf32> -> vector<8x384xf32>
    %c0_4 = arith.constant 0 : index
    %c0_5 = arith.constant 0 : index
    %5 = vector.load %arg3[%c0_4, %c0_5] : memref<1x384xf32, #tpu.memory_space<vmem>>, vector<1x384xf32>
    %6 = vector.broadcast %5 : vector<1x384xf32> to vector<8x384xf32>
    %7 = arith.addf %4, %6 : vector<8x384xf32>
    %8 = vector.extract_strided_slice %7 {offsets = [0, 0], sizes = [8, 128], strides = [1, 1]} : vector<8x384xf32> to vector<8x128xf32>
    %9 = vector.extract_strided_slice %7 {offsets = [0, 128], sizes = [8, 128], strides = [1, 1]} : vector<8x384xf32> to vector<8x128xf32>
    %10 = vector.extract_strided_slice %7 {offsets = [0, 256], sizes = [8, 128], strides = [1, 1]} : vector<8x384xf32> to vector<8x128xf32>
    %cst_6 = arith.constant 0.176776692 : f32
    %11 = vector.broadcast %cst_6 : f32 to vector<8x128xf32>
    %12 = arith.mulf %8, %11 : vector<8x128xf32>
    %13 = arith.truncf %12 : vector<8x128xf32> to vector<8x128xbf16>
    %14 = arith.truncf %9 : vector<8x128xf32> to vector<8x128xbf16>
    %15 = arith.truncf %10 : vector<8x128xf32> to vector<8x128xbf16>
    %16 = vector.extract_strided_slice %13 {offsets = [0, 0], sizes = [8, 32], strides = [1, 1]} : vector<8x128xbf16> to vector<8x32xbf16>
    %17 = vector.extract_strided_slice %13 {offsets = [0, 32], sizes = [8, 32], strides = [1, 1]} : vector<8x128xbf16> to vector<8x32xbf16>
    %18 = vector.extract_strided_slice %13 {offsets = [0, 64], sizes = [8, 32], strides = [1, 1]} : vector<8x128xbf16> to vector<8x32xbf16>
    %19 = vector.extract_strided_slice %13 {offsets = [0, 96], sizes = [8, 32], strides = [1, 1]} : vector<8x128xbf16> to vector<8x32xbf16>
    %20 = vector.shape_cast %16 : vector<8x32xbf16> to vector<1x8x32xbf16>
    %21 = vector.shape_cast %17 : vector<8x32xbf16> to vector<1x8x32xbf16>
    %22 = vector.shape_cast %18 : vector<8x32xbf16> to vector<1x8x32xbf16>
    %23 = vector.shape_cast %19 : vector<8x32xbf16> to vector<1x8x32xbf16>
    %24 = tpu.concatenate %20, %21, %22, %23 in 0 : vector<1x8x32xbf16>, vector<1x8x32xbf16>, vector<1x8x32xbf16>, vector<1x8x32xbf16> -> vector<4x8x32xbf16>
    %25 = vector.extract_strided_slice %14 {offsets = [0, 0], sizes = [8, 32], strides = [1, 1]} : vector<8x128xbf16> to vector<8x32xbf16>
    %26 = vector.extract_strided_slice %14 {offsets = [0, 32], sizes = [8, 32], strides = [1, 1]} : vector<8x128xbf16> to vector<8x32xbf16>
    %27 = vector.extract_strided_slice %14 {offsets = [0, 64], sizes = [8, 32], strides = [1, 1]} : vector<8x128xbf16> to vector<8x32xbf16>
    %28 = vector.extract_strided_slice %14 {offsets = [0, 96], sizes = [8, 32], strides = [1, 1]} : vector<8x128xbf16> to vector<8x32xbf16>
    %29 = vector.shape_cast %25 : vector<8x32xbf16> to vector<1x8x32xbf16>
    %30 = vector.shape_cast %26 : vector<8x32xbf16> to vector<1x8x32xbf16>
    %31 = vector.shape_cast %27 : vector<8x32xbf16> to vector<1x8x32xbf16>
    %32 = vector.shape_cast %28 : vector<8x32xbf16> to vector<1x8x32xbf16>
    %33 = tpu.concatenate %29, %30, %31, %32 in 0 : vector<1x8x32xbf16>, vector<1x8x32xbf16>, vector<1x8x32xbf16>, vector<1x8x32xbf16> -> vector<4x8x32xbf16>
    %34 = vector.extract_strided_slice %15 {offsets = [0, 0], sizes = [8, 32], strides = [1, 1]} : vector<8x128xbf16> to vector<8x32xbf16>
    %35 = vector.extract_strided_slice %15 {offsets = [0, 32], sizes = [8, 32], strides = [1, 1]} : vector<8x128xbf16> to vector<8x32xbf16>
    %36 = vector.extract_strided_slice %15 {offsets = [0, 64], sizes = [8, 32], strides = [1, 1]} : vector<8x128xbf16> to vector<8x32xbf16>
    %37 = vector.extract_strided_slice %15 {offsets = [0, 96], sizes = [8, 32], strides = [1, 1]} : vector<8x128xbf16> to vector<8x32xbf16>
    %38 = vector.shape_cast %34 : vector<8x32xbf16> to vector<1x8x32xbf16>
    %39 = vector.shape_cast %35 : vector<8x32xbf16> to vector<1x8x32xbf16>
    %40 = vector.shape_cast %36 : vector<8x32xbf16> to vector<1x8x32xbf16>
    %41 = vector.shape_cast %37 : vector<8x32xbf16> to vector<1x8x32xbf16>
    %42 = tpu.concatenate %38, %39, %40, %41 in 0 : vector<1x8x32xbf16>, vector<1x8x32xbf16>, vector<1x8x32xbf16>, vector<1x8x32xbf16> -> vector<4x8x32xbf16>
    "tpu.trace_start"() <{level = 10 : i32, message = "hqd,hkd->hqk"}> : () -> ()
    %cst_7 = arith.constant dense<0.000000e+00> : vector<4x8x8xf32>
    %43 = tpu.matmul %24, %33, %cst_7 {dimension_numbers = #tpu.dot_dimension_numbers<[2], [2], [1], [1], [0, 0, 0, 1, 1, 1], [0], [0]>} : vector<4x8x32xbf16>, vector<4x8x32xbf16>, vector<4x8x8xf32> -> vector<4x8x8xf32>
    "tpu.trace_stop"() : () -> ()
    %cst_8 = arith.constant dense<0xFF800000> : vector<4x8xf32>
    %44 = vector.multi_reduction <maximumf>, %43, %cst_8 [2] : vector<4x8x8xf32> to vector<4x8xf32>
    %45 = vector.shape_cast %44 : vector<4x8xf32> to vector<4x8x1xf32>
    %46 = vector.broadcast %45 : vector<4x8x1xf32> to vector<4x8x8xf32>
    %47 = arith.subf %43, %46 : vector<4x8x8xf32>
    %48 = math.exp %47 : vector<4x8x8xf32>
    %cst_9 = arith.constant dense<0.000000e+00> : vector<4x8xf32>
    %49 = vector.multi_reduction <add>, %48, %cst_9 [2] : vector<4x8x8xf32> to vector<4x8xf32>
    %50 = vector.shape_cast %49 : vector<4x8xf32> to vector<4x8x1xf32>
    %51 = arith.truncf %48 : vector<4x8x8xf32> to vector<4x8x8xbf16>
    "tpu.trace_start"() <{level = 10 : i32, message = "hqk,hkd->hqd"}> : () -> ()
    %cst_10 = arith.constant dense<0.000000e+00> : vector<4x8x32xf32>
    %52 = tpu.matmul %51, %42, %cst_10 {dimension_numbers = #tpu.dot_dimension_numbers<[2], [1], [1], [2], [0, 0, 0, 1, 1, 2], [0], [0]>} : vector<4x8x8xbf16>, vector<4x8x32xbf16>, vector<4x8x32xf32> -> vector<4x8x32xf32>
    "tpu.trace_stop"() : () -> ()
    %53 = tpu.reciprocal %50 {approx = true} : vector<4x8x1xf32> -> vector<4x8x1xf32>
    %54 = vector.broadcast %53 : vector<4x8x1xf32> to vector<4x8x32xf32>
    %55 = arith.mulf %52, %54 : vector<4x8x32xf32>
    %56 = vector.extract_strided_slice %55 {offsets = [0, 0, 0], sizes = [1, 8, 32], strides = [1, 1, 1]} : vector<4x8x32xf32> to vector<1x8x32xf32>
    %57 = vector.shape_cast %56 : vector<1x8x32xf32> to vector<8x32xf32>
    %58 = vector.extract_strided_slice %55 {offsets = [1, 0, 0], sizes = [1, 8, 32], strides = [1, 1, 1]} : vector<4x8x32xf32> to vector<1x8x32xf32>
    %59 = vector.shape_cast %58 : vector<1x8x32xf32> to vector<8x32xf32>
    %60 = vector.extract_strided_slice %55 {offsets = [2, 0, 0], sizes = [1, 8, 32], strides = [1, 1, 1]} : vector<4x8x32xf32> to vector<1x8x32xf32>
    %61 = vector.shape_cast %60 : vector<1x8x32xf32> to vector<8x32xf32>
    %62 = vector.extract_strided_slice %55 {offsets = [3, 0, 0], sizes = [1, 8, 32], strides = [1, 1, 1]} : vector<4x8x32xf32> to vector<1x8x32xf32>
    %63 = vector.shape_cast %62 : vector<1x8x32xf32> to vector<8x32xf32>
    %64 = tpu.concatenate %57, %59, %61, %63 in 1 : vector<8x32xf32>, vector<8x32xf32>, vector<8x32xf32>, vector<8x32xf32> -> vector<8x128xf32>
    %65 = arith.truncf %64 : vector<8x128xf32> to vector<8x128xbf16>
    %c0_11 = arith.constant 0 : index
    %c0_12 = arith.constant 0 : index
    %66 = vector.load %arg4[%c0_11, %c0_12] : memref<128x128xbf16, #tpu.memory_space<vmem>>, vector<128x128xbf16>
    %cst_13 = arith.constant dense<0.000000e+00> : vector<8x128xf32>
    %67 = tpu.matmul %65, %66, %cst_13 {dimension_numbers = #tpu.dot_dimension_numbers<[1], [0], [0], [1], [0, 0, 1, 1], [], []>} : vector<8x128xbf16>, vector<128x128xbf16>, vector<8x128xf32> -> vector<8x128xf32>
    %c0_14 = arith.constant 0 : index
    %c0_15 = arith.constant 0 : index
    %68 = vector.load %arg5[%c0_14, %c0_15] : memref<1x128xf32, #tpu.memory_space<vmem>>, vector<1x128xf32>
    %69 = vector.broadcast %68 : vector<1x128xf32> to vector<8x128xf32>
    %70 = arith.addf %67, %69 : vector<8x128xf32>
    %71 = arith.addf %70, %2 : vector<8x128xf32>
    %c0_16 = arith.constant 0 : index
    %c0_17 = arith.constant 0 : index
    %72 = vector.load %arg6[%c0_16, %c0_17] : memref<1x128xf32, #tpu.memory_space<vmem>>, vector<1x128xf32>
    %c0_18 = arith.constant 0 : index
    %c0_19 = arith.constant 0 : index
    %73 = vector.load %arg7[%c0_18, %c0_19] : memref<1x128xf32, #tpu.memory_space<vmem>>, vector<1x128xf32>
    %cst_20 = arith.constant dense<0.000000e+00> : vector<8xf32>
    %74 = vector.multi_reduction <add>, %71, %cst_20 [1] : vector<8x128xf32> to vector<8xf32>
    %75 = vector.shape_cast %74 : vector<8xf32> to vector<8x1xf32>
    %cst_21 = arith.constant 1.280000e+02 : f32
    %76 = vector.broadcast %cst_21 : f32 to vector<8x1xf32>
    %77 = arith.divf %75, %76 : vector<8x1xf32>
    %78 = vector.broadcast %77 : vector<8x1xf32> to vector<8x128xf32>
    %79 = arith.subf %71, %78 : vector<8x128xf32>
    %80 = arith.mulf %79, %79 : vector<8x128xf32>
    %cst_22 = arith.constant dense<0.000000e+00> : vector<8xf32>
    %81 = vector.multi_reduction <add>, %80, %cst_22 [1] : vector<8x128xf32> to vector<8xf32>
    %82 = vector.shape_cast %81 : vector<8xf32> to vector<8x1xf32>
    %cst_23 = arith.constant 1.280000e+02 : f32
    %83 = vector.broadcast %cst_23 : f32 to vector<8x1xf32>
    %84 = arith.divf %82, %83 : vector<8x1xf32>
    %85 = vector.broadcast %77 : vector<8x1xf32> to vector<8x128xf32>
    %86 = arith.subf %71, %85 : vector<8x128xf32>
    %cst_24 = arith.constant 9.99999974E-6 : f32
    %87 = vector.broadcast %cst_24 : f32 to vector<8x1xf32>
    %88 = arith.addf %84, %87 : vector<8x1xf32>
    %89 = math.rsqrt %88 : vector<8x1xf32>
    %90 = vector.broadcast %89 : vector<8x1xf32> to vector<8x128xf32>
    %91 = arith.mulf %86, %90 : vector<8x128xf32>
    %92 = vector.broadcast %72 : vector<1x128xf32> to vector<8x128xf32>
    %93 = arith.mulf %91, %92 : vector<8x128xf32>
    %94 = vector.broadcast %73 : vector<1x128xf32> to vector<8x128xf32>
    %95 = arith.addf %93, %94 : vector<8x128xf32>
    %96 = arith.truncf %95 : vector<8x128xf32> to vector<8x128xbf16>
    %c0_25 = arith.constant 0 : index
    %c0_26 = arith.constant 0 : index
    %97 = vector.load %arg8[%c0_25, %c0_26] : memref<128x256xbf16, #tpu.memory_space<vmem>>, vector<128x256xbf16>
    %cst_27 = arith.constant dense<0.000000e+00> : vector<8x256xf32>
    %98 = tpu.matmul %96, %97, %cst_27 {dimension_numbers = #tpu.dot_dimension_numbers<[1], [0], [0], [1], [0, 0, 1, 1], [], []>} : vector<8x128xbf16>, vector<128x256xbf16>, vector<8x256xf32> -> vector<8x256xf32>
    %c0_28 = arith.constant 0 : index
    %c0_29 = arith.constant 0 : index
    %99 = vector.load %arg9[%c0_28, %c0_29] : memref<1x256xf32, #tpu.memory_space<vmem>>, vector<1x256xf32>
    %100 = vector.broadcast %99 : vector<1x256xf32> to vector<8x256xf32>
    %101 = arith.addf %98, %100 : vector<8x256xf32>
    %cst_30 = arith.constant 0.000000e+00 : f32
    %102 = vector.broadcast %cst_30 : f32 to vector<8x256xf32>
    %103 = arith.maximumf %101, %102 : vector<8x256xf32>
    %104 = arith.truncf %103 : vector<8x256xf32> to vector<8x256xbf16>
    %c0_31 = arith.constant 0 : index
    %c0_32 = arith.constant 0 : index
    %105 = vector.load %arg10[%c0_31, %c0_32] : memref<256x128xbf16, #tpu.memory_space<vmem>>, vector<256x128xbf16>
    %cst_33 = arith.constant dense<0.000000e+00> : vector<8x128xf32>
    %106 = tpu.matmul %104, %105, %cst_33 {dimension_numbers = #tpu.dot_dimension_numbers<[1], [0], [0], [1], [0, 0, 1, 1], [], []>} : vector<8x256xbf16>, vector<256x128xbf16>, vector<8x128xf32> -> vector<8x128xf32>
    %c0_34 = arith.constant 0 : index
    %c0_35 = arith.constant 0 : index
    %107 = vector.load %arg11[%c0_34, %c0_35] : memref<1x128xf32, #tpu.memory_space<vmem>>, vector<1x128xf32>
    %108 = vector.broadcast %107 : vector<1x128xf32> to vector<8x128xf32>
    %109 = arith.addf %106, %108 : vector<8x128xf32>
    %110 = arith.addf %109, %95 : vector<8x128xf32>
    %c0_36 = arith.constant 0 : index
    %c0_37 = arith.constant 0 : index
    %111 = vector.load %arg12[%c0_36, %c0_37] : memref<1x128xf32, #tpu.memory_space<vmem>>, vector<1x128xf32>
    %c0_38 = arith.constant 0 : index
    %c0_39 = arith.constant 0 : index
    %112 = vector.load %arg13[%c0_38, %c0_39] : memref<1x128xf32, #tpu.memory_space<vmem>>, vector<1x128xf32>
    %cst_40 = arith.constant dense<0.000000e+00> : vector<8xf32>
    %113 = vector.multi_reduction <add>, %110, %cst_40 [1] : vector<8x128xf32> to vector<8xf32>
    %114 = vector.shape_cast %113 : vector<8xf32> to vector<8x1xf32>
    %cst_41 = arith.constant 1.280000e+02 : f32
    %115 = vector.broadcast %cst_41 : f32 to vector<8x1xf32>
    %116 = arith.divf %114, %115 : vector<8x1xf32>
    %117 = vector.broadcast %116 : vector<8x1xf32> to vector<8x128xf32>
    %118 = arith.subf %110, %117 : vector<8x128xf32>
    %119 = arith.mulf %118, %118 : vector<8x128xf32>
    %cst_42 = arith.constant dense<0.000000e+00> : vector<8xf32>
    %120 = vector.multi_reduction <add>, %119, %cst_42 [1] : vector<8x128xf32> to vector<8xf32>
    %121 = vector.shape_cast %120 : vector<8xf32> to vector<8x1xf32>
    %cst_43 = arith.constant 1.280000e+02 : f32
    %122 = vector.broadcast %cst_43 : f32 to vector<8x1xf32>
    %123 = arith.divf %121, %122 : vector<8x1xf32>
    %124 = vector.broadcast %116 : vector<8x1xf32> to vector<8x128xf32>
    %125 = arith.subf %110, %124 : vector<8x128xf32>
    %cst_44 = arith.constant 9.99999974E-6 : f32
    %126 = vector.broadcast %cst_44 : f32 to vector<8x1xf32>
    %127 = arith.addf %123, %126 : vector<8x1xf32>
    %128 = math.rsqrt %127 : vector<8x1xf32>
    %129 = vector.broadcast %128 : vector<8x1xf32> to vector<8x128xf32>
    %130 = arith.mulf %125, %129 : vector<8x128xf32>
    %131 = vector.broadcast %111 : vector<1x128xf32> to vector<8x128xf32>
    %132 = arith.mulf %130, %131 : vector<8x128xf32>
    %133 = vector.broadcast %112 : vector<1x128xf32> to vector<8x128xf32>
    %134 = arith.addf %132, %133 : vector<8x128xf32>
    %135 = arith.truncf %134 : vector<8x128xf32> to vector<8x128xbf16>
    %c0_45 = arith.constant 0 : index
    %c0_46 = arith.constant 0 : index
    %c0_47 = arith.constant 0 : index
    %136 = vector.load %arg14[%c0_45, %c0_46, %c0_47] : memref<1x8x128xbf16, #tpu.memory_space<vmem>>, vector<1x8x128xbf16>
    %137 = vector.shape_cast %136 : vector<1x8x128xbf16> to vector<8x128xbf16>
    %138 = vector.shape_cast %135 : vector<8x128xbf16> to vector<1x8x128xbf16>
    tpu.vector_store %arg14[%c0_45, %c0_46, %c0_47], %138 {strides = array<i32>} : memref<1x8x128xbf16, #tpu.memory_space<vmem>>, vector<1x8x128xbf16>,
    return
  }
  func.func @transform_0(%arg0: i32) -> (i32, i32, i32) {
    %c0_i32 = arith.constant 0 : i32
    %c0_i32_0 = arith.constant 0 : i32
    %c0_i32_1 = arith.constant 0 : i32
    return %arg0, %c0_i32, %c0_i32_0 : i32, i32, i32
  }
  func.func @transform_1(%arg0: i32) -> (i32, i32) {
    %c0_i32 = arith.constant 0 : i32
    %c0_i32_0 = arith.constant 0 : i32
    %c0_i32_1 = arith.constant 0 : i32
    return %c0_i32, %c0_i32_0 : i32, i32
  }
  func.func @transform_2(%arg0: i32) -> (i32, i32) {
    %c0_i32 = arith.constant 0 : i32
    %c0_i32_0 = arith.constant 0 : i32
    %c0_i32_1 = arith.constant 0 : i32
    return %c0_i32, %c0_i32_0 : i32, i32
  }
  func.func @transform_3(%arg0: i32) -> (i32, i32) {
    %c0_i32 = arith.constant 0 : i32
    %c0_i32_0 = arith.constant 0 : i32
    %c0_i32_1 = arith.constant 0 : i32
    return %c0_i32, %c0_i32_0 : i32, i32
  }
  func.func @transform_4(%arg0: i32) -> (i32, i32) {
    %c0_i32 = arith.constant 0 : i32
    %c0_i32_0 = arith.constant 0 : i32
    %c0_i32_1 = arith.constant 0 : i32
    return %c0_i32, %c0_i32_0 : i32, i32
  }
  func.func @transform_5(%arg0: i32) -> (i32, i32) {
    %c0_i32 = arith.constant 0 : i32
    %c0_i32_0 = arith.constant 0 : i32
    %c0_i32_1 = arith.constant 0 : i32
    return %c0_i32, %c0_i32_0 : i32, i32
  }
  func.func @transform_6(%arg0: i32) -> (i32, i32) {
    %c0_i32 = arith.constant 0 : i32
    %c0_i32_0 = arith.constant 0 : i32
    %c0_i32_1 = arith.constant 0 : i32
    return %c0_i32, %c0_i32_0 : i32, i32
  }
  func.func @transform_7(%arg0: i32) -> (i32, i32) {
    %c0_i32 = arith.constant 0 : i32
    %c0_i32_0 = arith.constant 0 : i32
    %c0_i32_1 = arith.constant 0 : i32
    return %c0_i32, %c0_i32_0 : i32, i32
  }
  func.func @transform_8(%arg0: i32) -> (i32, i32) {
    %c0_i32 = arith.constant 0 : i32
    %c0_i32_0 = arith.constant 0 : i32
    %c0_i32_1 = arith.constant 0 : i32
    return %c0_i32, %c0_i32_0 : i32, i32
  }
  func.func @transform_9(%arg0: i32) -> (i32, i32) {
    %c0_i32 = arith.constant 0 : i32
    %c0_i32_0 = arith.constant 0 : i32
    %c0_i32_1 = arith.constant 0 : i32
    return %c0_i32, %c0_i32_0 : i32, i32
  }
  func.func @transform_10(%arg0: i32) -> (i32, i32) {
    %c0_i32 = arith.constant 0 : i32
    %c0_i32_0 = arith.constant 0 : i32
    %c0_i32_1 = arith.constant 0 : i32
    return %c0_i32, %c0_i32_0 : i32, i32
  }
  func.func @transform_11(%arg0: i32) -> (i32, i32) {
    %c0_i32 = arith.constant 0 : i32
    %c0_i32_0 = arith.constant 0 : i32
    %c0_i32_1 = arith.constant 0 : i32
    return %c0_i32, %c0_i32_0 : i32, i32
  }
  func.func @transform_12(%arg0: i32) -> (i32, i32) {
    %c0_i32 = arith.constant 0 : i32
    %c0_i32_0 = arith.constant 0 : i32
    %c0_i32_1 = arith.constant 0 : i32
    return %c0_i32, %c0_i32_0 : i32, i32
  }
  func.func @transform_13(%arg0: i32) -> (i32, i32, i32) {
    %c0_i32 = arith.constant 0 : i32
    %c0_i32_0 = arith.constant 0 : i32
    %c0_i32_1 = arith.constant 0 : i32
    return %arg0, %c0_i32, %c0_i32_0 : i32, i32, i32
  }
}

</mosaic_0001>

<llo_original>
// kernel: tpu_custom_call.1
$region0: #{tpu_custom_call.1}
  #allocation0 [shape = 'u32[]', space=smem, size = 0x4, offset = 0x4, fixed_abs, tag = 'smem constant byte address 0x4 - core index']
  #allocation1 [shape = 'u32[144,128]{1,0:T(1,128)}', space=vmem, size = 0x12000, scoped, tag = 'internal scratch']
  %s0 = inlined_call_operand.hbm [shape: bf16[2,8,128], index: 0, kind: input, shape index: {}]
  %s1 = inlined_call_operand.hbm [shape: bf16[128,384], index: 1, kind: input, shape index: {}]
  %s2 = inlined_call_operand.vmem [shape: f32[1,384], index: 2, kind: input, shape index: {}]
  %s3 = inlined_call_operand.hbm [shape: bf16[128,128], index: 3, kind: input, shape index: {}]
  %s4 = inlined_call_operand.vmem [shape: f32[1,128], index: 4, kind: input, shape index: {}]
  %s5 = inlined_call_operand.vmem [shape: f32[1,128], index: 5, kind: input, shape index: {}]
  %s6 = inlined_call_operand.vmem [shape: f32[1,128], index: 6, kind: input, shape index: {}]
  %s7 = inlined_call_operand.hbm [shape: bf16[128,256], index: 7, kind: input, shape index: {}]
  %s8 = inlined_call_operand.vmem [shape: f32[1,256], index: 8, kind: input, shape index: {}]
  %s9 = inlined_call_operand.hbm [shape: bf16[256,128], index: 9, kind: input, shape index: {}]
  %s10 = inlined_call_operand.vmem [shape: f32[1,128], index: 10, kind: input, shape index: {}]
  %s11 = inlined_call_operand.vmem [shape: f32[1,128], index: 11, kind: input, shape index: {}]
  %s12 = inlined_call_operand.vmem [shape: f32[1,128], index: 12, kind: input, shape index: {}]
  %s13 = inlined_call_operand.hbm [shape: bf16[2,8,128], index: 13, kind: output, shape index: {}]
  %s14 = sld [smem:[#allocation0]]
  $region105: #{tpu_custom_call.1} parent=0
    _
  %s16 = ssub.s32 1, %s14
  %s17 = scalar_select 0, %s16, %s14
  $region1: #{tpu_custom_call.1} parent=0
    #allocation2 [shape = 'u8[4096]{0}', space=vmem, size = 0x1000, scoped, tag = 'input window, operand 0']
    #allocation3 [shape = 's32[2]{0}', space=sflag, size = 0x8, scoped, tag = 'scoped memory for tpu_custom_call.1']
    #allocation4 [shape = 's32[2]{0}', space=sflag, size = 0x8, scoped, tag = 'scoped memory for tpu_custom_call.1']
    #allocation5 [shape = 'u8[98304]{0}', space=vmem, size = 0x18000, scoped, tag = 'input window, operand 1, single buffered']
    #allocation6 [shape = 's32[1]{0}', space=sflag, size = 0x4, scoped, tag = 'scoped memory for tpu_custom_call.1']
    #allocation7 [shape = 'u8[32768]{0}', space=vmem, size = 0x8000, scoped, tag = 'input window, operand 3, single buffered']
    #allocation8 [shape = 'u8[65536]{0}', space=vmem, size = 0x10000, scoped, tag = 'input window, operand 7, single buffered']
    #allocation9 [shape = 's32[1]{0}', space=sflag, size = 0x4, scoped, tag = 'scoped memory for tpu_custom_call.1']
    #allocation10 [shape = 'u8[65536]{0}', space=vmem, size = 0x10000, scoped, tag = 'input window, operand 9, single buffered']
    #allocation11 [shape = 'u8[4096]{0}', space=vmem, size = 0x1000, scoped, tag = 'output window, operand 0']
    %18 = vsyncpa [#allocation3], 0
    %s19 = scalar_lea.sflag [#allocation3], 1
    %20 = vsyncpa %s19, 0
    %21 = vsyncpa [#allocation6], 0
    %22 = vsyncpa [#allocation9], 0
    %23 = vsyncpa [#allocation4], 0
    %s24 = scalar_lea.sflag [#allocation4], 1
    %25 = vsyncpa %s24, 0
    loop: start=0, step=1, limit=4
    $region2: #{tpu_custom_call.1} parent=1 // loop_pre_header
      _
    $region3: #{tpu_custom_call.1} parent=1 // loop_header
      %s27 = sphi 0, %s31
      %p28 = scmp.ge.s32.totalorder %s27, 4
      %s37 = sphi 0, %s39
      %s40 = sphi 0, %s37
      %s41 = sphi 0, %s40
      %s57 = sphi 0, %s41
      %s61 = sphi 0, %s61
      %s63 = sphi 0, %s61
      %s64 = sphi 0, %s63
      %s78 = sphi 0, %s64
      %s82 = sphi 0, %s82
      %s84 = sphi 0, %s82
      %s85 = sphi 0, %s84
      %s99 = sphi 0, %s85
      %s103 = sphi 0, %s103
      %s105 = sphi 0, %s103
      %s106 = sphi 0, %s105
      %s120 = sphi 0, %s106
      %s124 = sphi 0, %s124
      %s126 = sphi 0, %s124
      %s127 = sphi 0, %s126
      %s141 = sphi 0, %s127
      %s145 = sphi 0, %s145
      %s147 = sphi 0, %s145
      %s148 = sphi 0, %s147
      %s162 = sphi 0, %s148
      %s166 = sphi 0, %s166
      %s168 = sphi 0, %s166
      %s169 = sphi 0, %s168
      %s183 = sphi 0, %s169
      %s187 = sphi 0, %s187
      %s189 = sphi 0, %s187
      %s190 = sphi 0, %s189
      %s204 = sphi 0, %s190
      %s208 = sphi 0, %s208
      %s210 = sphi 0, %s208
      %s211 = sphi 0, %s210
      %s225 = sphi 0, %s211
      %s229 = sphi 0, %s229
      %s231 = sphi 0, %s229
      %s232 = sphi 0, %s231
      %s246 = sphi 0, %s232
      %s250 = sphi 0, %s250
      %s252 = sphi 0, %s250
      %s253 = sphi 0, %s252
      %s267 = sphi 0, %s253
      %s271 = sphi 0, %s271
      %s273 = sphi 0, %s271
      %s274 = sphi 0, %s273
      %s288 = sphi 0, %s274
      %s292 = sphi 0, %s292
      %s294 = sphi 0, %s292
      %s295 = sphi 0, %s294
      %s309 = sphi 0, %s295
      %s315 = sphi 0, %s317
      %s318 = sphi 0, %s315
      %s319 = sphi 0, %s318
      %s335 = sphi 0, %s319
    $region4: #{tpu_custom_call.1} parent=1 // loop_header_branch
      %30 = sbr.rel (%p28) target = $region8
    $region5: #{tpu_custom_call.1} parent=1 // loop_body
      %s32 = ssub.s32 %s27, 1
      %s33 = ssub.s32 %s27, 2
      %s34 = sadd.s32 %s27, 1
      %s35 = ssub.s32 %s27, %s34
      %p36 = scmp.eq.s32.totalorder %s35, 0
      %s38 = sadd.s32 %s37, 1
      %s39 = scalar_select %p36, %s37, %s38
      %p42 = pneg %p36
      %p43 = scmp.eq.s32.totalorder %s27, 1
      %p44 = por %p42, %p43
      %p45 = scmp.ne.s32.totalorder %s37, %s40
      %p46 = scmp.eq.s32.totalorder %s27, 0
      %p47 = por %p45, %p46
      %p48 = scmp.ne.s32.totalorder %s37, %s40
      %p49 = scmp.eq.s32.totalorder %s32, 1
      %p50 = por %p48, %p49
      %p51 = scmp.ne.s32.totalorder %s40, %s41
      %p52 = scmp.eq.s32.totalorder %s32, 0
      %p53 = por %p51, %p52
      %p54 = scmp.ne.s32.totalorder %s40, %s41
      %p55 = scmp.eq.s32.totalorder %s33, 1
      %p56 = por %p54, %p55
      %p58 = scmp.ne.s32.totalorder %s41, %s57
      %p59 = scmp.eq.s32.totalorder %s33, 0
      %p60 = por %p58, %p59
      %s62 = sadd.s32 %s61, 1
      %p65 = scmp.eq.s32.totalorder %s27, 1
      %p66 = scmp.ne.s32.totalorder %s61, %s63
      %p67 = scmp.eq.s32.totalorder %s27, 0
      %p68 = por %p66, %p67
      %p69 = scmp.ne.s32.totalorder %s61, %s63
      %p70 = scmp.eq.s32.totalorder %s32, 1
      %p71 = por %p69, %p70
      %p72 = scmp.ne.s32.totalorder %s63, %s64
      %p73 = scmp.eq.s32.totalorder %s32, 0
      %p74 = por %p72, %p73
      %p75 = scmp.ne.s32.totalorder %s63, %s64
      %p76 = scmp.eq.s32.totalorder %s33, 1
      %p77 = por %p75, %p76
      %p79 = scmp.ne.s32.totalorder %s64, %s78
      %p80 = scmp.eq.s32.totalorder %s33, 0
      %p81 = por %p79, %p80
      %s83 = sadd.s32 %s82, 1
      %p86 = scmp.eq.s32.totalorder %s27, 1
      %p87 = scmp.ne.s32.totalorder %s82, %s84
      %p88 = scmp.eq.s32.totalorder %s27, 0
      %p89 = por %p87, %p88
      %p90 = scmp.ne.s32.totalorder %s82, %s84
      %p91 = scmp.eq.s32.totalorder %s32, 1
      %p92 = por %p90, %p91
      %p93 = scmp.ne.s32.totalorder %s84, %s85
      %p94 = scmp.eq.s32.totalorder %s32, 0
      %p95 = por %p93, %p94
      %p96 = scmp.ne.s32.totalorder %s84, %s85
      %p97 = scmp.eq.s32.totalorder %s33, 1
      %p98 = por %p96, %p97
      %p100 = scmp.ne.s32.totalorder %s85, %s99
      %p101 = scmp.eq.s32.totalorder %s33, 0
      %p102 = por %p100, %p101
      %s104 = sadd.s32 %s103, 1
      %p107 = scmp.eq.s32.totalorder %s27, 1
      %p108 = scmp.ne.s32.totalorder %s103, %s105
      %p109 = scmp.eq.s32.totalorder %s27, 0
      %p110 = por %p108, %p109
      %p111 = scmp.ne.s32.totalorder %s103, %s105
      %p112 = scmp.eq.s32.totalorder %s32, 1
      %p113 = por %p111, %p112
      %p114 = scmp.ne.s32.totalorder %s105, %s106
      %p115 = scmp.eq.s32.totalorder %s32, 0
      %p116 = por %p114, %p115
      %p117 = scmp.ne.s32.totalorder %s105, %s106
      %p118 = scmp.eq.s32.totalorder %s33, 1
      %p119 = por %p117, %p118
      %p121 = scmp.ne.s32.totalorder %s106, %s120
      %p122 = scmp.eq.s32.totalorder %s33, 0
      %p123 = por %p121, %p122
      %s125 = sadd.s32 %s124, 1
      %p128 = scmp.eq.s32.totalorder %s27, 1
      %p129 = scmp.ne.s32.totalorder %s124, %s126
      %p130 = scmp.eq.s32.totalorder %s27, 0
      %p131 = por %p129, %p130
      %p132 = scmp.ne.s32.totalorder %s124, %s126
      %p133 = scmp.eq.s32.totalorder %s32, 1
      %p134 = por %p132, %p133
      %p135 = scmp.ne.s32.totalorder %s126, %s127
      %p136 = scmp.eq.s32.totalorder %s32, 0
      %p137 = por %p135, %p136
      %p138 = scmp.ne.s32.totalorder %s126, %s127
      %p139 = scmp.eq.s32.totalorder %s33, 1
      %p140 = por %p138, %p139
      %p142 = scmp.ne.s32.totalorder %s127, %s141
      %p143 = scmp.eq.s32.totalorder %s33, 0
      %p144 = por %p142, %p143
      %s146 = sadd.s32 %s145, 1
      %p149 = scmp.eq.s32.totalorder %s27, 1
      %p150 = scmp.ne.s32.totalorder %s145, %s147
      %p151 = scmp.eq.s32.totalorder %s27, 0
      %p152 = por %p150, %p151
      %p153 = scmp.ne.s32.totalorder %s145, %s147
      %p154 = scmp.eq.s32.totalorder %s32, 1
      %p155 = por %p153, %p154
      %p156 = scmp.ne.s32.totalorder %s147, %s148
      %p157 = scmp.eq.s32.totalorder %s32, 0
      %p158 = por %p156, %p157
      %p159 = scmp.ne.s32.totalorder %s147, %s148
      %p160 = scmp.eq.s32.totalorder %s33, 1
      %p161 = por %p159, %p160
      %p163 = scmp.ne.s32.totalorder %s148, %s162
      %p164 = scmp.eq.s32.totalorder %s33, 0
      %p165 = por %p163, %p164
      %s167 = sadd.s32 %s166, 1
      %p170 = scmp.eq.s32.totalorder %s27, 1
      %p171 = scmp.ne.s32.totalorder %s166, %s168
      %p172 = scmp.eq.s32.totalorder %s27, 0
      %p173 = por %p171, %p172
      %p174 = scmp.ne.s32.totalorder %s166, %s168
      %p175 = scmp.eq.s32.totalorder %s32, 1
      %p176 = por %p174, %p175
      %p177 = scmp.ne.s32.totalorder %s168, %s169
      %p178 = scmp.eq.s32.totalorder %s32, 0
      %p179 = por %p177, %p178
      %p180 = scmp.ne.s32.totalorder %s168, %s169
      %p181 = scmp.eq.s32.totalorder %s33, 1
      %p182 = por %p180, %p181
      %p184 = scmp.ne.s32.totalorder %s169, %s183
      %p185 = scmp.eq.s32.totalorder %s33, 0
      %p186 = por %p184, %p185
      %s188 = sadd.s32 %s187, 1
      %p191 = scmp.eq.s32.totalorder %s27, 1
      %p192 = scmp.ne.s32.totalorder %s187, %s189
      %p193 = scmp.eq.s32.totalorder %s27, 0
      %p194 = por %p192, %p193
      %p195 = scmp.ne.s32.totalorder %s187, %s189
      %p196 = scmp.eq.s32.totalorder %s32, 1
      %p197 = por %p195, %p196
      %p198 = scmp.ne.s32.totalorder %s189, %s190
      %p199 = scmp.eq.s32.totalorder %s32, 0
      %p200 = por %p198, %p199
      %p201 = scmp.ne.s32.totalorder %s189, %s190
      %p202 = scmp.eq.s32.totalorder %s33, 1
      %p203 = por %p201, %p202
      %p205 = scmp.ne.s32.totalorder %s190, %s204
      %p206 = scmp.eq.s32.totalorder %s33, 0
      %p207 = por %p205, %p206
      %s209 = sadd.s32 %s208, 1
      %p212 = scmp.eq.s32.totalorder %s27, 1
      %p213 = scmp.ne.s32.totalorder %s208, %s210
      %p214 = scmp.eq.s32.totalorder %s27, 0
      %p215 = por %p213, %p214
      %p216 = scmp.ne.s32.totalorder %s208, %s210
      %p217 = scmp.eq.s32.totalorder %s32, 1
      %p218 = por %p216, %p217
      %p219 = scmp.ne.s32.totalorder %s210, %s211
      %p220 = scmp.eq.s32.totalorder %s32, 0
      %p221 = por %p219, %p220
      %p222 = scmp.ne.s32.totalorder %s210, %s211
      %p223 = scmp.eq.s32.totalorder %s33, 1
      %p224 = por %p222, %p223
      %p226 = scmp.ne.s32.totalorder %s211, %s225
      %p227 = scmp.eq.s32.totalorder %s33, 0
      %p228 = por %p226, %p227
      %s230 = sadd.s32 %s229, 1
      %p233 = scmp.eq.s32.totalorder %s27, 1
      %p234 = scmp.ne.s32.totalorder %s229, %s231
      %p235 = scmp.eq.s32.totalorder %s27, 0
      %p236 = por %p234, %p235
      %p237 = scmp.ne.s32.totalorder %s229, %s231
      %p238 = scmp.eq.s32.totalorder %s32, 1
      %p239 = por %p237, %p238
      %p240 = scmp.ne.s32.totalorder %s231, %s232
      %p241 = scmp.eq.s32.totalorder %s32, 0
      %p242 = por %p240, %p241
      %p243 = scmp.ne.s32.totalorder %s231, %s232
      %p244 = scmp.eq.s32.totalorder %s33, 1
      %p245 = por %p243, %p244
      %p247 = scmp.ne.s32.totalorder %s232, %s246
      %p248 = scmp.eq.s32.totalorder %s33, 0
      %p249 = por %p247, %p248
      %s251 = sadd.s32 %s250, 1
      %p254 = scmp.eq.s32.totalorder %s27, 1
      %p255 = scmp.ne.s32.totalorder %s250, %s252
      %p256 = scmp.eq.s32.totalorder %s27, 0
      %p257 = por %p255, %p256
      %p258 = scmp.ne.s32.totalorder %s250, %s252
      %p259 = scmp.eq.s32.totalorder %s32, 1
      %p260 = por %p258, %p259
      %p261 = scmp.ne.s32.totalorder %s252, %s253
      %p262 = scmp.eq.s32.totalorder %s32, 0
      %p263 = por %p261, %p262
      %p264 = scmp.ne.s32.totalorder %s252, %s253
      %p265 = scmp.eq.s32.totalorder %s33, 1
      %p266 = por %p264, %p265
      %p268 = scmp.ne.s32.totalorder %s253, %s267
      %p269 = scmp.eq.s32.totalorder %s33, 0
      %p270 = por %p268, %p269
      %s272 = sadd.s32 %s271, 1
      %p275 = scmp.eq.s32.totalorder %s27, 1
      %p276 = scmp.ne.s32.totalorder %s271, %s273
      %p277 = scmp.eq.s32.totalorder %s27, 0
      %p278 = por %p276, %p277
      %p279 = scmp.ne.s32.totalorder %s271, %s273
      %p280 = scmp.eq.s32.totalorder %s32, 1
      %p281 = por %p279, %p280
      %p282 = scmp.ne.s32.totalorder %s273, %s274
      %p283 = scmp.eq.s32.totalorder %s32, 0
      %p284 = por %p282, %p283
      %p285 = scmp.ne.s32.totalorder %s273, %s274
      %p286 = scmp.eq.s32.totalorder %s33, 1
      %p287 = por %p285, %p286
      %p289 = scmp.ne.s32.totalorder %s274, %s288
      %p290 = scmp.eq.s32.totalorder %s33, 0
      %p291 = por %p289, %p290
      %s293 = sadd.s32 %s292, 1
      %p296 = scmp.eq.s32.totalorder %s27, 1
      %p297 = scmp.ne.s32.totalorder %s292, %s294
      %p298 = scmp.eq.s32.totalorder %s27, 0
      %p299 = por %p297, %p298
      %p300 = scmp.ne.s32.totalorder %s292, %s294
      %p301 = scmp.eq.s32.totalorder %s32, 1
      %p302 = por %p300, %p301
      %p303 = scmp.ne.s32.totalorder %s294, %s295
      %p304 = scmp.eq.s32.totalorder %s32, 0
      %p305 = por %p303, %p304
      %p306 = scmp.ne.s32.totalorder %s294, %s295
      %p307 = scmp.eq.s32.totalorder %s33, 1
      %p308 = por %p306, %p307
      %p310 = scmp.ne.s32.totalorder %s295, %s309
      %p311 = scmp.eq.s32.totalorder %s33, 0
      %p312 = por %p310, %p311
      %s313 = ssub.s32 %s27, %s34
      %p314 = scmp.eq.s32.totalorder %s313, 0
      %s316 = sadd.s32 %s315, 1
      %s317 = scalar_select %p314, %s315, %s316
      %p320 = pneg %p314
      %p321 = scmp.eq.s32.totalorder %s27, 1
      %p322 = por %p320, %p321
      %p323 = scmp.ne.s32.totalorder %s315, %s318
      %p324 = scmp.eq.s32.totalorder %s27, 0
      %p325 = por %p323, %p324
      %p326 = scmp.ne.s32.totalorder %s315, %s318
      %p327 = scmp.eq.s32.totalorder %s32, 1
      %p328 = por %p326, %p327
      %p329 = scmp.ne.s32.totalorder %s318, %s319
      %p330 = scmp.eq.s32.totalorder %s32, 0
      %p331 = por %p329, %p330
      %p332 = scmp.ne.s32.totalorder %s318, %s319
      %p333 = scmp.eq.s32.totalorder %s33, 1
      %p334 = por %p332, %p333
      %p336 = scmp.ne.s32.totalorder %s319, %s335
      %p337 = scmp.eq.s32.totalorder %s33, 0
      %p338 = por %p336, %p337
      %p339 = scmp.le.s32.totalorder 1, %s27
      %p340 = scmp.lt.s32.totalorder %s27, 3
      %p341 = pnand %p339, %p340
      %p342 = pneg %p341
      // Predicated region
      $region9: #{tpu_custom_call.1} parent=5 // pred_check
        _
      $region10: #{tpu_custom_call.1} parent=5 // pred_check_branch
        %344 = sbr.rel (%p341) target = $region12
      $region11: #{tpu_custom_call.1} parent=5 // pred_region
        %s345 = ssub.s32 %s27, 1
        // Predicated region
        $region13: #{tpu_custom_call.1} parent=11 // pred_check
          %p346 = pneg %p74
        $region14: #{tpu_custom_call.1} parent=11 // pred_check_branch
          %348 = sbr.rel (%p346) target = $region16
        $region15: #{tpu_custom_call.1} parent=11 // pred_region
          %s350 = ssub.s32 3072, 3072
          %351 = vsyncadd [#allocation6], %s350
          %s352 = sshll.u32 [#allocation5], 4
          %s353 = int_to_ptr.vmem [resolvable:$true] %s352
          %358 = dma.hbm_to_vmem [thread:$0]  %s1, 3072, %s353, [#allocation6], 192, 192, 12
        $region16: #{tpu_custom_call.1} parent=11 // pred_fallthru
          _
        // Predicated region
        $region17: #{tpu_custom_call.1} parent=11 // pred_check
          %p359 = pneg %p95
        $region18: #{tpu_custom_call.1} parent=11 // pred_check_branch
          %361 = sbr.rel (%p359) target = $region20
        $region19: #{tpu_custom_call.1} parent=11 // pred_region
          _
        $region20: #{tpu_custom_call.1} parent=11 // pred_fallthru
          _
        // Predicated region
        $region21: #{tpu_custom_call.1} parent=11 // pred_check
          %p362 = pneg %p116
        $region22: #{tpu_custom_call.1} parent=11 // pred_check_branch
          %364 = sbr.rel (%p362) target = $region24
        $region23: #{tpu_custom_call.1} parent=11 // pred_region
          %s366 = ssub.s32 1024, 1024
          %367 = vsyncadd [#allocation6], %s366
          %s368 = sshll.u32 [#allocation7], 4
          %s369 = int_to_ptr.vmem [resolvable:$true] %s368
          %374 = dma.hbm_to_vmem [thread:$0]  %s3, 1024, %s369, [#allocation6], 64, 64, 4
        $region24: #{tpu_custom_call.1} parent=11 // pred_fallthru
          _
        // Predicated region
        $region25: #{tpu_custom_call.1} parent=11 // pred_check
          %p375 = pneg %p137
        $region26: #{tpu_custom_call.1} parent=11 // pred_check_branch
          %377 = sbr.rel (%p375) target = $region28
        $region27: #{tpu_custom_call.1} parent=11 // pred_region
          _
        $region28: #{tpu_custom_call.1} parent=11 // pred_fallthru
          _
        // Predicated region
        $region29: #{tpu_custom_call.1} parent=11 // pred_check
          %p378 = pneg %p158
        $region30: #{tpu_custom_call.1} parent=11 // pred_check_branch
          %380 = sbr.rel (%p378) target = $region32
        $region31: #{tpu_custom_call.1} parent=11 // pred_region
          _
        $region32: #{tpu_custom_call.1} parent=11 // pred_fallthru
          _
        // Predicated region
        $region33: #{tpu_custom_call.1} parent=11 // pred_check
          %p381 = pneg %p179
        $region34: #{tpu_custom_call.1} parent=11 // pred_check_branch
          %383 = sbr.rel (%p381) target = $region36
        $region35: #{tpu_custom_call.1} parent=11 // pred_region
          _
        $region36: #{tpu_custom_call.1} parent=11 // pred_fallthru
          _
        // Predicated region
        $region37: #{tpu_custom_call.1} parent=11 // pred_check
          %p384 = pneg %p200
        $region38: #{tpu_custom_call.1} parent=11 // pred_check_branch
          %386 = sbr.rel (%p384) target = $region40
        $region39: #{tpu_custom_call.1} parent=11 // pred_region
          %s388 = ssub.s32 2048, 2048
          %389 = vsyncadd [#allocation9], %s388
          %s390 = sshll.u32 [#allocation8], 4
          %s391 = int_to_ptr.vmem [resolvable:$true] %s390
          %396 = dma.hbm_to_vmem [thread:$0]  %s7, 2048, %s391, [#allocation9], 128, 128, 8
        $region40: #{tpu_custom_call.1} parent=11 // pred_fallthru
          _
        // Predicated region
        $region41: #{tpu_custom_call.1} parent=11 // pred_check
          %p397 = pneg %p221
        $region42: #{tpu_custom_call.1} parent=11 // pred_check_branch
          %399 = sbr.rel (%p397) target = $region44
        $region43: #{tpu_custom_call.1} parent=11 // pred_region
          _
        $region44: #{tpu_custom_call.1} parent=11 // pred_fallthru
          _
        // Predicated region
        $region45: #{tpu_custom_call.1} parent=11 // pred_check
          %p400 = pneg %p242
        $region46: #{tpu_custom_call.1} parent=11 // pred_check_branch
          %402 = sbr.rel (%p400) target = $region48
        $region47: #{tpu_custom_call.1} parent=11 // pred_region
          %s404 = ssub.s32 2048, 2048
          %405 = vsyncadd [#allocation9], %s404
          %s406 = sshll.u32 [#allocation10], 4
          %s407 = int_to_ptr.vmem [resolvable:$true] %s406
          %412 = dma.hbm_to_vmem [thread:$0]  %s9, 2048, %s407, [#allocation9], 64, 64, 4
        $region48: #{tpu_custom_call.1} parent=11 // pred_fallthru
          _
        // Predicated region
        $region49: #{tpu_custom_call.1} parent=11 // pred_check
          %p413 = pneg %p263
        $region50: #{tpu_custom_call.1} parent=11 // pred_check_branch
          %415 = sbr.rel (%p413) target = $region52
        $region51: #{tpu_custom_call.1} parent=11 // pred_region
          _
        $region52: #{tpu_custom_call.1} parent=11 // pred_fallthru
          _
        // Predicated region
        $region53: #{tpu_custom_call.1} parent=11 // pred_check
          %p416 = pneg %p284
        $region54: #{tpu_custom_call.1} parent=11 // pred_check_branch
          %418 = sbr.rel (%p416) target = $region56
        $region55: #{tpu_custom_call.1} parent=11 // pred_region
          _
        $region56: #{tpu_custom_call.1} parent=11 // pred_fallthru
          _
        // Predicated region
        $region57: #{tpu_custom_call.1} parent=11 // pred_check
          %p419 = pneg %p305
        $region58: #{tpu_custom_call.1} parent=11 // pred_check_branch
          %421 = sbr.rel (%p419) target = $region60
        $region59: #{tpu_custom_call.1} parent=11 // pred_region
          _
        $region60: #{tpu_custom_call.1} parent=11 // pred_fallthru
          _
      $region12: #{tpu_custom_call.1} parent=5 // pred_fallthru
        _
      %p422 = scmp.lt.s32.totalorder %s27, 2
      // Predicated region
      $region61: #{tpu_custom_call.1} parent=5 // pred_check
        %p423 = pneg %p422
      $region62: #{tpu_custom_call.1} parent=5 // pred_check_branch
        %425 = sbr.rel (%p423) target = $region64
      $region63: #{tpu_custom_call.1} parent=5 // pred_region
        // Predicated region
        $region65: #{tpu_custom_call.1} parent=63 // pred_check
          %p426 = pneg %p47
        $region66: #{tpu_custom_call.1} parent=63 // pred_check_branch
          %428 = sbr.rel (%p426) target = $region68
        $region67: #{tpu_custom_call.1} parent=63 // pred_region
          %s429 = sand.u32 %s37, 1
          %s430 = scalar_lea.sflag [#allocation3], %s429
          %s431 = sand.u32 %s37, 1
          %s432 = smul.addr %s431, 4
          %s433 = scalar_lea.vmem [#allocation2], %s432
          %s435 = ssub.s32 64, 64
          %436 = vsyncadd %s430, %s435
          %s437 = smul.addr %s27, 64
          %s438 = scalar_lea.hbm %s0, %s437
          %s440 = sshll.u32 %s433, 4
          %s441 = int_to_ptr.vmem [resolvable:$true] %s440
          %443 = dma.hbm_to_vmem [thread:$0]  %s438, 64, %s441, %s430
        $region68: #{tpu_custom_call.1} parent=63 // pred_fallthru
          _
      $region64: #{tpu_custom_call.1} parent=5 // pred_fallthru
        _
      %p444 = scmp.le.s32.totalorder 1, %s27
      %p445 = scmp.lt.s32.totalorder %s27, 3
      %p446 = pnand %p444, %p445
      %p447 = pneg %p446
      // Predicated region
      $region69: #{tpu_custom_call.1} parent=5 // pred_check
        _
      $region70: #{tpu_custom_call.1} parent=5 // pred_check_branch
        %449 = sbr.rel (%p446) target = $region72
      $region71: #{tpu_custom_call.1} parent=5 // pred_region
        %s450 = ssub.s32 %s27, 1
        %s451 = sand.u32 %s40, 1
        %s452 = scalar_lea.sflag [#allocation3], %s451
        %s453 = sand.u32 %s40, 1
        %s454 = smul.addr %s453, 4
        %s455 = scalar_lea.vmem [#allocation2], %s454
        // Predicated region
        $region73: #{tpu_custom_call.1} parent=71 // pred_check
          %p456 = pneg %p53
        $region74: #{tpu_custom_call.1} parent=71 // pred_check_branch
          %458 = sbr.rel (%p456) target = $region76
        $region75: #{tpu_custom_call.1} parent=71 // pred_region
          %459 = dma.done %s452, 64
        $region76: #{tpu_custom_call.1} parent=71 // pred_fallthru
          _
        // Predicated region
        $region77: #{tpu_custom_call.1} parent=71 // pred_check
          %p460 = pneg %p74
        $region78: #{tpu_custom_call.1} parent=71 // pred_check_branch
          %462 = sbr.rel (%p460) target = $region80
        $region79: #{tpu_custom_call.1} parent=71 // pred_region
          %463 = dma.done [#allocation6], 3072
        $region80: #{tpu_custom_call.1} parent=71 // pred_fallthru
          _
        // Predicated region
        $region81: #{tpu_custom_call.1} parent=71 // pred_check
          %p464 = pneg %p116
        $region82: #{tpu_custom_call.1} parent=71 // pred_check_branch
          %466 = sbr.rel (%p464) target = $region84
        $region83: #{tpu_custom_call.1} parent=71 // pred_region
          %467 = dma.done [#allocation6], 1024
        $region84: #{tpu_custom_call.1} parent=71 // pred_fallthru
          _
        // Predicated region
        $region85: #{tpu_custom_call.1} parent=71 // pred_check
          %p468 = pneg %p200
        $region86: #{tpu_custom_call.1} parent=71 // pred_check_branch
          %470 = sbr.rel (%p468) target = $region88
        $region87: #{tpu_custom_call.1} parent=71 // pred_region
          %471 = dma.done [#allocation9], 2048
        $region88: #{tpu_custom_call.1} parent=71 // pred_fallthru
          _
        // Predicated region
        $region89: #{tpu_custom_call.1} parent=71 // pred_check
          %p472 = pneg %p242
        $region90: #{tpu_custom_call.1} parent=71 // pred_check_branch
          %474 = sbr.rel (%p472) target = $region92
        $region91: #{tpu_custom_call.1} parent=71 // pred_region
          %475 = dma.done [#allocation9], 2048
        $region92: #{tpu_custom_call.1} parent=71 // pred_fallthru
          _
        %s476 = sand.u32 %s40, 1
        %s477 = scalar_lea.sflag [#allocation3], %s476
        %s478 = sand.u32 %s40, 1
        %s479 = smul.addr %s478, 4
        %s480 = scalar_lea.vmem [#allocation2], %s479
        %p481 = pneg %p53
        %p482 = pneg %p50
        %p483 = pneg %p74
        %p484 = pneg %p71
        %p485 = pneg %p95
        %p486 = pneg %p92
        %p487 = pneg %p116
        %p488 = pneg %p113
        %p489 = pneg %p137
        %p490 = pneg %p134
        %p491 = pneg %p158
        %p492 = pneg %p155
        %p493 = pneg %p179
        %p494 = pneg %p176
        %p495 = pneg %p200
        %p496 = pneg %p197
        %p497 = pneg %p221
        %p498 = pneg %p218
        %p499 = pneg %p242
        %p500 = pneg %p239
        %p501 = pneg %p263
        %p502 = pneg %p260
        %p503 = pneg %p284
        %p504 = pneg %p281
        %p505 = pneg %p305
        %p506 = pneg %p302
        %p507 = pneg %p331
        %p508 = pneg %p328
        %s509 = sand.u32 %s318, 1
        %s510 = scalar_lea.sflag [#allocation4], %s509
        %s511 = sand.u32 %s318, 1
        %s512 = smul.addr %s511, 4
        %s513 = scalar_lea.vmem [#allocation11], %s512
        %v515 = vld [vmem:[%s455] sm:$0xf]
        %v516 = vunpack.c.l.bf16 %v515
        %v517 = vld [vmem:[#allocation5] sm:$0xff]
        %v518 = vld [vmem:[#allocation5 + $0x8] sm:$0xf]
        %v519 = vld [vmem:[#allocation5 + $0xc] sm:$0xff]
        %v520 = vld [vmem:[#allocation5 + $0x14] sm:$0xf]
        %v521 = vld [vmem:[#allocation5 + $0x18] sm:$0xff]
        %v522 = vld [vmem:[#allocation5 + $0x20] sm:$0xf]
        %v523 = vld [vmem:[#allocation5 + $0x24] sm:$0xff]
        %v524 = vld [vmem:[#allocation5 + $0x2c] sm:$0xf]
        %v525 = vld [vmem:[#allocation5 + $0x30] sm:$0xff]
        %v526 = vld [vmem:[#allocation5 + $0x38] sm:$0xf]
        %v527 = vld [vmem:[#allocation5 + $0x3c] sm:$0xff]
        %v528 = vld [vmem:[#allocation5 + $0x44] sm:$0xf]
        %v529 = vld [vmem:[#allocation5 + $0x48] sm:$0xff]
        %v530 = vld [vmem:[#allocation5 + $0x50] sm:$0xf]
        %v531 = vld [vmem:[#allocation5 + $0x54] sm:$0xff]
        %v532 = vld [vmem:[#allocation5 + $0x5c] sm:$0xf]
        %v533 = vld [vmem:[#allocation5 + $0x60] sm:$0xff]
        %v534 = vld [vmem:[#allocation5 + $0x68] sm:$0xf]
        %v535 = vld [vmem:[#allocation5 + $0x6c] sm:$0xff]
        %v536 = vld [vmem:[#allocation5 + $0x74] sm:$0xf]
        %v537 = vld [vmem:[#allocation5 + $0x78] sm:$0xff]
        %v538 = vld [vmem:[#allocation5 + $0x80] sm:$0xf]
        %v539 = vld [vmem:[#allocation5 + $0x84] sm:$0xff]
        %v540 = vld [vmem:[#allocation5 + $0x8c] sm:$0xf]
        %v541 = vld [vmem:[#allocation5 + $0x90] sm:$0xff]
        %v542 = vld [vmem:[#allocation5 + $0x98] sm:$0xf]
        %v543 = vld [vmem:[#allocation5 + $0x9c] sm:$0xff]
        %v544 = vld [vmem:[#allocation5 + $0xa4] sm:$0xf]
        %v545 = vld [vmem:[#allocation5 + $0xa8] sm:$0xff]
        %v546 = vld [vmem:[#allocation5 + $0xb0] sm:$0xf]
        %v547 = vld [vmem:[#allocation5 + $0xb4] sm:$0xff]
        %v548 = vld [vmem:[#allocation5 + $0xbc] sm:$0xf]
        %v549 = vld [vmem:[%s2] sm:$0x7]
        %v551 = vlaneseq
        %v552 = vshrl.u32 %v551, 7
        %v553 = vsub.s32 0, %v552
        %v554 = vrot.slane %v549, %v553
        %v555 = vlaneseq
        %v556 = vshrl.u32 %v555, 7
        %v557 = vsub.s32 1, %v556
        %v558 = vrot.slane %v549, %v557
        %v559 = vlaneseq
        %v560 = vshrl.u32 %v559, 7
        %v561 = vsub.s32 2, %v560
        %v562 = vrot.slane %v549, %v561
        %v598 = vunpack.c.l.b16 %v517
        %v599 = vunpack.c.h.b16 %v517
        %v600 = vunpack.c.l.b16 %v518
        %v601 = vunpack.c.l.b16 %v519
        %v602 = vunpack.c.h.b16 %v519
        %v603 = vunpack.c.l.b16 %v520
        %v604 = vunpack.c.l.b16 %v521
        %v605 = vunpack.c.h.b16 %v521
        %v606 = vunpack.c.l.b16 %v522
        %v607 = vunpack.c.l.b16 %v523
        %v608 = vunpack.c.h.b16 %v523
        %v609 = vunpack.c.l.b16 %v524
        %v610 = vunpack.c.l.b16 %v525
        %v611 = vunpack.c.h.b16 %v525
        %v612 = vunpack.c.l.b16 %v526
        %v613 = vunpack.c.l.b16 %v527
        %v614 = vunpack.c.h.b16 %v527
        %v615 = vunpack.c.l.b16 %v528
        %v616 = vunpack.c.l.b16 %v529
        %v617 = vunpack.c.h.b16 %v529
        %v618 = vunpack.c.l.b16 %v530
        %v619 = vunpack.c.l.b16 %v531
        %v620 = vunpack.c.h.b16 %v531
        %v621 = vunpack.c.l.b16 %v532
        %v622 = vunpack.c.l.b16 %v533
        %v623 = vunpack.c.h.b16 %v533
        %v624 = vunpack.c.l.b16 %v534
        %v625 = vunpack.c.l.b16 %v535
        %v626 = vunpack.c.h.b16 %v535
        %v627 = vunpack.c.l.b16 %v536
        %v628 = vunpack.c.l.b16 %v537
        %v629 = vunpack.c.h.b16 %v537
        %v630 = vunpack.c.l.b16 %v538
        %v631 = vunpack.c.l.b16 %v539
        %v632 = vunpack.c.h.b16 %v539
        %v633 = vunpack.c.l.b16 %v540
        %v634 = vunpack.c.l.b16 %v541
        %v635 = vunpack.c.h.b16 %v541
        %v636 = vunpack.c.l.b16 %v542
        %v637 = vunpack.c.l.b16 %v543
        %v638 = vunpack.c.h.b16 %v543
        %v639 = vunpack.c.l.b16 %v544
        %v640 = vunpack.c.l.b16 %v545
        %v641 = vunpack.c.h.b16 %v545
        %v642 = vunpack.c.l.b16 %v546
        %v643 = vunpack.c.l.b16 %v547
        %v644 = vunpack.c.h.b16 %v547
        %v645 = vunpack.c.l.b16 %v548
        %v646 = vpack.c.b16 %v601, %v598
        %v647 = vpack.c.b16 %v602, %v599
        %v648 = vpack.c.b16 %v603, %v600
        %v649 = vpack.c.b16 %v607, %v604
        %v650 = vpack.c.b16 %v608, %v605
        %v651 = vpack.c.b16 %v609, %v606
        %v652 = vpack.c.b16 %v613, %v610
        %v653 = vpack.c.b16 %v614, %v611
        %v654 = vpack.c.b16 %v615, %v612
        %v655 = vpack.c.b16 %v619, %v616
        %v656 = vpack.c.b16 %v620, %v617
        %v657 = vpack.c.b16 %v621, %v618
        %v658 = vpack.c.b16 %v625, %v622
        %v659 = vpack.c.b16 %v626, %v623
        %v660 = vpack.c.b16 %v627, %v624
        %v661 = vpack.c.b16 %v631, %v628
        %v662 = vpack.c.b16 %v632, %v629
        %v663 = vpack.c.b16 %v633, %v630
        %v664 = vpack.c.b16 %v637, %v634
        %v665 = vpack.c.b16 %v638, %v635
        %v666 = vpack.c.b16 %v639, %v636
        %v667 = vpack.c.b16 %v643, %v640
        %v668 = vpack.c.b16 %v644, %v641
        %v669 = vpack.c.b16 %v645, %v642
        %694 = vmatprep.subr.bf16.mxu0 %v647
        %695 = vmatpush1.bf16.msra.mxu0 %v646
        %696 = vmatprep.subr.bf16.mxu0 %v650
        %697 = vmatpush1.bf16.msra.mxu0 %v649
        %698 = vmatprep.subr.bf16.mxu0 %v653
        %699 = vmatpush1.bf16.msra.mxu0 %v652
        %700 = vmatprep.subr.bf16.mxu0 %v656
        %701 = vmatpush1.bf16.msra.mxu0 %v655
        %702 = vmatprep.subr.bf16.mxu0 %v659
        %703 = vmatpush1.bf16.msra.mxu0 %v658
        %704 = vmatprep.subr.bf16.mxu0 %v662
        %705 = vmatpush1.bf16.msra.mxu0 %v661
        %706 = vmatprep.subr.bf16.mxu0 %v665
        %707 = vmatpush1.bf16.msra.mxu0 %v664
        %708 = vmatprep.subr.bf16.mxu0 %v668
        %709 = vmatpush1.bf16.msra.mxu0 %v667
        %710 = vmatprep.subr.bf16.mxu0 0
        %711 = vmatpush1.bf16.msra.mxu0 0
        %712 = vmatprep.subr.bf16.mxu0 0
        %713 = vmatpush1.bf16.msra.mxu0 0
        %714 = vmatprep.subr.bf16.mxu0 0
        %715 = vmatpush1.bf16.msra.mxu0 0
        %716 = vmatprep.subr.bf16.mxu0 0
        %717 = vmatpush1.bf16.msra.mxu0 0
        %718 = vmatprep.subr.bf16.mxu0 0
        %719 = vmatpush1.bf16.msra.mxu0 0
        %720 = vmatprep.subr.bf16.mxu0 0
        %721 = vmatpush1.bf16.msra.mxu0 0
        %722 = vmatprep.subr.bf16.mxu0 0
        %723 = vmatpush1.bf16.msra.mxu0 0
        %724 = vmatprep.subr.bf16.mxu0 0
        %725 = vmatpush1.bf16.msra.mxu0 0
        %726 = vmatprep.mubr.bf16.mxu0 0
        %727 = vmatmul.mubr.bf16.gmra.mrb[0].mxu0 %v515
        %v728 = vpop.f32.mrb[0].mxu0
        %v729 = vadd.f32 %v554, %v728
        %v730 = vpop.f32.mrb[0].mxu0
        %v731 = vadd.f32 %v558, %v730
        %v732 = vpop.f32.mrb[0].mxu0
        %v733 = vpop.f32.mrb[0].mxu0
        %734 = vdwg.mxu0
        %735 = vmatprep.subr.bf16.mxu0 0
        %736 = vmatpush1.bf16.msra.mxu0 %v648
        %737 = vmatprep.subr.bf16.mxu0 0
        %738 = vmatpush1.bf16.msra.mxu0 %v651
        %739 = vmatprep.subr.bf16.mxu0 0
        %740 = vmatpush1.bf16.msra.mxu0 %v654
        %741 = vmatprep.subr.bf16.mxu0 0
        %742 = vmatpush1.bf16.msra.mxu0 %v657
        %743 = vmatprep.subr.bf16.mxu0 0
        %744 = vmatpush1.bf16.msra.mxu0 %v660
        %745 = vmatprep.subr.bf16.mxu0 0
        %746 = vmatpush1.bf16.msra.mxu0 %v663
        %747 = vmatprep.subr.bf16.mxu0 0
        %748 = vmatpush1.bf16.msra.mxu0 %v666
        %749 = vmatprep.subr.bf16.mxu0 0
        %750 = vmatpush1.bf16.msra.mxu0 %v669
        %751 = vmatprep.subr.bf16.mxu0 0
        %752 = vmatpush1.bf16.msra.mxu0 0
        %753 = vmatprep.subr.bf16.mxu0 0
        %754 = vmatpush1.bf16.msra.mxu0 0
        %755 = vmatprep.subr.bf16.mxu0 0
        %756 = vmatpush1.bf16.msra.mxu0 0
        %757 = vmatprep.subr.bf16.mxu0 0
        %758 = vmatpush1.bf16.msra.mxu0 0
        %759 = vmatprep.subr.bf16.mxu0 0
        %760 = vmatpush1.bf16.msra.mxu0 0
        %761 = vmatprep.subr.bf16.mxu0 0
        %762 = vmatpush1.bf16.msra.mxu0 0
        %763 = vmatprep.subr.bf16.mxu0 0
        %764 = vmatpush1.bf16.msra.mxu0 0
        %765 = vmatprep.subr.bf16.mxu0 0
        %766 = vmatpush1.bf16.msra.mxu0 0
        %767 = vmatprep.mubr.bf16.mxu0 0
        %768 = vmatmul.mubr.bf16.gmra.mrb[0].mxu0 %v515
        %v769 = vpop.f32.mrb[0].mxu0
        %v770 = vadd.f32 %v562, %v769
        %v771 = vpop.f32.mrb[0].mxu0
        %v772 = vpop.f32.mrb[0].mxu0
        %v773 = vpop.f32.mrb[0].mxu0
        %774 = vdwg.mxu0
        %v775 = vmul.f32 %v729, 0.17677669
        %v776 = vpack.c.bf16 %v775, %v775
        %v777 = vpack.c.bf16 %v731, %v731
        %v778 = vpack.c.bf16 %v770, %v770
        %780 = vrot.lane.b32.xlu0 %v776, 96
        %v781 = vpop.permute.xlu0 %780
        %782 = vrot.lane.b32.xlu0 %v776, 64
        %v783 = vpop.permute.xlu0 %782
        %784 = vrot.lane.b32.xlu0 %v776, 32
        %v785 = vpop.permute.xlu0 %784
        %787 = vrot.lane.b32.xlu0 %v777, 96
        %v788 = vpop.permute.xlu0 %787
        %789 = vrot.lane.b32.xlu0 %v777, 64
        %v790 = vpop.permute.xlu0 %789
        %791 = vrot.lane.b32.xlu0 %v777, 32
        %v792 = vpop.permute.xlu0 %791
        %794 = vrot.lane.b32.xlu0 %v778, 96
        %v795 = vpop.permute.xlu0 %794
        %796 = vrot.lane.b32.xlu0 %v778, 64
        %v797 = vpop.permute.xlu0 %796
        %798 = vrot.lane.b32.xlu0 %v778, 32
        %v799 = vpop.permute.xlu0 %798
        %vm800 = vcmask 261120
        %v802 = vsel %vm800, %v776, 0
        %v805 = vsel %vm800, %v777, 0
        %807 = vmatprep.subr.bf16.mxu0 0
        %808 = vmatpush1.bf16.xpose.msra.mxu0 %v805
        %809 = vmatprep.subr.bf16.mxu0 0
        %810 = vmatpush1.bf16.xpose.msra.mxu0 0
        %811 = vmatprep.subr.bf16.mxu0 0
        %812 = vmatpush1.bf16.xpose.msra.mxu0 0
        %813 = vmatprep.subr.bf16.mxu0 0
        %814 = vmatpush1.bf16.xpose.msra.mxu0 0
        %815 = vmatprep.subr.bf16.mxu0 0
        %816 = vmatpush1.bf16.xpose.msra.mxu0 0
        %817 = vmatprep.subr.bf16.mxu0 0
        %818 = vmatpush1.bf16.xpose.msra.mxu0 0
        %819 = vmatprep.subr.bf16.mxu0 0
        %820 = vmatpush1.bf16.xpose.msra.mxu0 0
        %821 = vmatprep.subr.bf16.mxu0 0
        %822 = vmatpush1.bf16.xpose.msra.mxu0 0
        %823 = vmatprep.subr.bf16.mxu0 0
        %824 = vmatpush1.bf16.xpose.msra.mxu0 0
        %825 = vmatprep.subr.bf16.mxu0 0
        %826 = vmatpush1.bf16.xpose.msra.mxu0 0
        %827 = vmatprep.subr.bf16.mxu0 0
        %828 = vmatpush1.bf16.xpose.msra.mxu0 0
        %829 = vmatprep.subr.bf16.mxu0 0
        %830 = vmatpush1.bf16.xpose.msra.mxu0 0
        %831 = vmatprep.subr.bf16.mxu0 0
        %832 = vmatpush1.bf16.xpose.msra.mxu0 0
        %833 = vmatprep.subr.bf16.mxu0 0
        %834 = vmatpush1.bf16.xpose.msra.mxu0 0
        %835 = vmatprep.subr.bf16.mxu0 0
        %836 = vmatpush1.bf16.xpose.msra.mxu0 0
        %837 = vmatprep.subr.bf16.mxu0 0
        %838 = vmatpush1.bf16.xpose.msra.mxu0 0
        %839 = vmatprep.mubr.bf16.mxu0 0
        %840 = vmatmul.mubr.bf16.gmra.mrb[0].mxu0 %v802
        %v841 = vpop.f32.mrb[0].mxu0
        %v842 = vadd.f32 0.0, %v841
        %v843 = vpop.f32.mrb[0].mxu0
        %v844 = vpop.f32.mrb[0].mxu0
        %v845 = vpop.f32.mrb[0].mxu0
        %846 = vdwg.mxu0
        %v848 = vsel %vm800, %v781, 0
        %v851 = vsel %vm800, %v788, 0
        %853 = vmatprep.subr.bf16.mxu0 0
        %854 = vmatpush1.bf16.xpose.msra.mxu0 %v851
        %855 = vmatprep.subr.bf16.mxu0 0
        %856 = vmatpush1.bf16.xpose.msra.mxu0 0
        %857 = vmatprep.subr.bf16.mxu0 0
        %858 = vmatpush1.bf16.xpose.msra.mxu0 0
        %859 = vmatprep.subr.bf16.mxu0 0
        %860 = vmatpush1.bf16.xpose.msra.mxu0 0
        %861 = vmatprep.subr.bf16.mxu0 0
        %862 = vmatpush1.bf16.xpose.msra.mxu0 0
        %863 = vmatprep.subr.bf16.mxu0 0
        %864 = vmatpush1.bf16.xpose.msra.mxu0 0
        %865 = vmatprep.subr.bf16.mxu0 0
        %866 = vmatpush1.bf16.xpose.msra.mxu0 0
        %867 = vmatprep.subr.bf16.mxu0 0
        %868 = vmatpush1.bf16.xpose.msra.mxu0 0
        %869 = vmatprep.subr.bf16.mxu0 0
        %870 = vmatpush1.bf16.xpose.msra.mxu0 0
        %871 = vmatprep.subr.bf16.mxu0 0
        %872 = vmatpush1.bf16.xpose.msra.mxu0 0
        %873 = vmatprep.subr.bf16.mxu0 0
        %874 = vmatpush1.bf16.xpose.msra.mxu0 0
        %875 = vmatprep.subr.bf16.mxu0 0
        %876 = vmatpush1.bf16.xpose.msra.mxu0 0
        %877 = vmatprep.subr.bf16.mxu0 0
        %878 = vmatpush1.bf16.xpose.msra.mxu0 0
        %879 = vmatprep.subr.bf16.mxu0 0
        %880 = vmatpush1.bf16.xpose.msra.mxu0 0
        %881 = vmatprep.subr.bf16.mxu0 0
        %882 = vmatpush1.bf16.xpose.msra.mxu0 0
        %883 = vmatprep.subr.bf16.mxu0 0
        %884 = vmatpush1.bf16.xpose.msra.mxu0 0
        %885 = vmatprep.mubr.bf16.mxu0 0
        %886 = vmatmul.mubr.bf16.gmra.mrb[0].mxu0 %v848
        %v887 = vpop.f32.mrb[0].mxu0
        %v888 = vadd.f32 0.0, %v887
        %v889 = vpop.f32.mrb[0].mxu0
        %v890 = vpop.f32.mrb[0].mxu0
        %v891 = vpop.f32.mrb[0].mxu0
        %892 = vdwg.mxu0
        %v894 = vsel %vm800, %v783, 0
        %v897 = vsel %vm800, %v790, 0
        %899 = vmatprep.subr.bf16.mxu0 0
        %900 = vmatpush1.bf16.xpose.msra.mxu0 %v897
        %901 = vmatprep.subr.bf16.mxu0 0
        %902 = vmatpush1.bf16.xpose.msra.mxu0 0
        %903 = vmatprep.subr.bf16.mxu0 0
        %904 = vmatpush1.bf16.xpose.msra.mxu0 0
        %905 = vmatprep.subr.bf16.mxu0 0
        %906 = vmatpush1.bf16.xpose.msra.mxu0 0
        %907 = vmatprep.subr.bf16.mxu0 0
        %908 = vmatpush1.bf16.xpose.msra.mxu0 0
        %909 = vmatprep.subr.bf16.mxu0 0
        %910 = vmatpush1.bf16.xpose.msra.mxu0 0
        %911 = vmatprep.subr.bf16.mxu0 0
        %912 = vmatpush1.bf16.xpose.msra.mxu0 0
        %913 = vmatprep.subr.bf16.mxu0 0
        %914 = vmatpush1.bf16.xpose.msra.mxu0 0
        %915 = vmatprep.subr.bf16.mxu0 0
        %916 = vmatpush1.bf16.xpose.msra.mxu0 0
        %917 = vmatprep.subr.bf16.mxu0 0
        %918 = vmatpush1.bf16.xpose.msra.mxu0 0
        %919 = vmatprep.subr.bf16.mxu0 0
        %920 = vmatpush1.bf16.xpose.msra.mxu0 0
        %921 = vmatprep.subr.bf16.mxu0 0
        %922 = vmatpush1.bf16.xpose.msra.mxu0 0
        %923 = vmatprep.subr.bf16.mxu0 0
        %924 = vmatpush1.bf16.xpose.msra.mxu0 0
        %925 = vmatprep.subr.bf16.mxu0 0
        %926 = vmatpush1.bf16.xpose.msra.mxu0 0
        %927 = vmatprep.subr.bf16.mxu0 0
        %928 = vmatpush1.bf16.xpose.msra.mxu0 0
        %929 = vmatprep.subr.bf16.mxu0 0
        %930 = vmatpush1.bf16.xpose.msra.mxu0 0
        %931 = vmatprep.mubr.bf16.mxu0 0
        %932 = vmatmul.mubr.bf16.gmra.mrb[0].mxu0 %v894
        %v933 = vpop.f32.mrb[0].mxu0
        %v934 = vadd.f32 0.0, %v933
        %v935 = vpop.f32.mrb[0].mxu0
        %v936 = vpop.f32.mrb[0].mxu0
        %v937 = vpop.f32.mrb[0].mxu0
        %938 = vdwg.mxu0
        %v940 = vsel %vm800, %v785, 0
        %v943 = vsel %vm800, %v792, 0
        %945 = vmatprep.subr.bf16.mxu0 0
        %946 = vmatpush1.bf16.xpose.msra.mxu0 %v943
        %947 = vmatprep.subr.bf16.mxu0 0
        %948 = vmatpush1.bf16.xpose.msra.mxu0 0
        %949 = vmatprep.subr.bf16.mxu0 0
        %950 = vmatpush1.bf16.xpose.msra.mxu0 0
        %951 = vmatprep.subr.bf16.mxu0 0
        %952 = vmatpush1.bf16.xpose.msra.mxu0 0
        %953 = vmatprep.subr.bf16.mxu0 0
        %954 = vmatpush1.bf16.xpose.msra.mxu0 0
        %955 = vmatprep.subr.bf16.mxu0 0
        %956 = vmatpush1.bf16.xpose.msra.mxu0 0
        %957 = vmatprep.subr.bf16.mxu0 0
        %958 = vmatpush1.bf16.xpose.msra.mxu0 0
        %959 = vmatprep.subr.bf16.mxu0 0
        %960 = vmatpush1.bf16.xpose.msra.mxu0 0
        %961 = vmatprep.subr.bf16.mxu0 0
        %962 = vmatpush1.bf16.xpose.msra.mxu0 0
        %963 = vmatprep.subr.bf16.mxu0 0
        %964 = vmatpush1.bf16.xpose.msra.mxu0 0
        %965 = vmatprep.subr.bf16.mxu0 0
        %966 = vmatpush1.bf16.xpose.msra.mxu0 0
        %967 = vmatprep.subr.bf16.mxu0 0
        %968 = vmatpush1.bf16.xpose.msra.mxu0 0
        %969 = vmatprep.subr.bf16.mxu0 0
        %970 = vmatpush1.bf16.xpose.msra.mxu0 0
        %971 = vmatprep.subr.bf16.mxu0 0
        %972 = vmatpush1.bf16.xpose.msra.mxu0 0
        %973 = vmatprep.subr.bf16.mxu0 0
        %974 = vmatpush1.bf16.xpose.msra.mxu0 0
        %975 = vmatprep.subr.bf16.mxu0 0
        %976 = vmatpush1.bf16.xpose.msra.mxu0 0
        %977 = vmatprep.mubr.bf16.mxu0 0
        %978 = vmatmul.mubr.bf16.gmra.mrb[0].mxu0 %v940
        %v979 = vpop.f32.mrb[0].mxu0
        %v980 = vadd.f32 0.0, %v979
        %v981 = vpop.f32.mrb[0].mxu0
        %v982 = vpop.f32.mrb[0].mxu0
        %v983 = vpop.f32.mrb[0].mxu0
        %984 = vdwg.mxu0
        %vm985 = vcmask 64512
        %v986 = vsel %vm985, %v842, -inf
        %987 = vmax.xlane.f32.xlu0 %v986
        %v988 = vpop.xlane.xlu0 %987
        %v989 = vsel %vm985, %v888, -inf
        %990 = vmax.xlane.f32.xlu0 %v989
        %v991 = vpop.xlane.xlu0 %990
        %v992 = vsel %vm985, %v934, -inf
        %993 = vmax.xlane.f32.xlu0 %v992
        %v994 = vpop.xlane.xlu0 %993
        %v995 = vsel %vm985, %v980, -inf
        %996 = vmax.xlane.f32.xlu0 %v995
        %v997 = vpop.xlane.xlu0 %996
        %v998 = vsub.f32 %v842, %v988
        %v999 = vsub.f32 %v888, %v991
        %v1000 = vsub.f32 %v934, %v994
        %v1001 = vsub.f32 %v980, %v997
        %v1002 = vmul.f32 %v998, 1.442695
        %v1003 = vpow.pop %v1002
        %v1004 = vmul.f32 %v999, 1.442695
        %v1005 = vpow.pop %v1004
        %v1006 = vmul.f32 %v1000, 1.442695
        %v1007 = vpow.pop %v1006
        %v1008 = vmul.f32 %v1001, 1.442695
        %v1009 = vpow.pop %v1008
        %v1010 = vsel %vm985, %v1003, 0.0
        %1011 = vadd.xlane.f32.xlu0 %v1010
        %v1012 = vpop.xlane.xlu0 %1011
        %v1013 = vsel %vm985, %v1005, 0.0
        %1014 = vadd.xlane.f32.xlu0 %v1013
        %v1015 = vpop.xlane.xlu0 %1014
        %v1016 = vsel %vm985, %v1007, 0.0
        %1017 = vadd.xlane.f32.xlu0 %v1016
        %v1018 = vpop.xlane.xlu0 %1017
        %v1019 = vsel %vm985, %v1009, 0.0
        %1020 = vadd.xlane.f32.xlu0 %v1019
        %v1021 = vpop.xlane.xlu0 %1020
        %v1022 = vpack.c.bf16 %v1003, %v1003
        %v1023 = vpack.c.bf16 %v1005, %v1005
        %v1024 = vpack.c.bf16 %v1007, %v1007
        %v1025 = vpack.c.bf16 %v1009, %v1009
        %v1027 = vsel %vm985, %v1022, 0
        %vm1029 = vcmask 1043456
        %v1031 = vsel %vm1029, %v778, 0
        %1033 = vmatprep.subr.bf16.mxu0 0
        %1034 = vmatpush1.bf16.msra.mxu0 %v1031
        %1035 = vmatprep.subr.bf16.mxu0 0
        %1036 = vmatpush1.bf16.msra.mxu0 0
        %1037 = vmatprep.subr.bf16.mxu0 0
        %1038 = vmatpush1.bf16.msra.mxu0 0
        %1039 = vmatprep.subr.bf16.mxu0 0
        %1040 = vmatpush1.bf16.msra.mxu0 0
        %1041 = vmatprep.subr.bf16.mxu0 0
        %1042 = vmatpush1.bf16.msra.mxu0 0
        %1043 = vmatprep.subr.bf16.mxu0 0
        %1044 = vmatpush1.bf16.msra.mxu0 0
        %1045 = vmatprep.subr.bf16.mxu0 0
        %1046 = vmatpush1.bf16.msra.mxu0 0
        %1047 = vmatprep.subr.bf16.mxu0 0
        %1048 = vmatpush1.bf16.msra.mxu0 0
        %1049 = vmatprep.subr.bf16.mxu0 0
        %1050 = vmatpush1.bf16.msra.mxu0 0
        %1051 = vmatprep.subr.bf16.mxu0 0
        %1052 = vmatpush1.bf16.msra.mxu0 0
        %1053 = vmatprep.subr.bf16.mxu0 0
        %1054 = vmatpush1.bf16.msra.mxu0 0
        %1055 = vmatprep.subr.bf16.mxu0 0
        %1056 = vmatpush1.bf16.msra.mxu0 0
        %1057 = vmatprep.subr.bf16.mxu0 0
        %1058 = vmatpush1.bf16.msra.mxu0 0
        %1059 = vmatprep.subr.bf16.mxu0 0
        %1060 = vmatpush1.bf16.msra.mxu0 0
        %1061 = vmatprep.subr.bf16.mxu0 0
        %1062 = vmatpush1.bf16.msra.mxu0 0
        %1063 = vmatprep.subr.bf16.mxu0 0
        %1064 = vmatpush1.bf16.msra.mxu0 0
        %1065 = vmatprep.mubr.bf16.mxu0 0
        %1066 = vmatmul.mubr.bf16.gmra.mrb[0].mxu0 %v1027
        %v1067 = vpop.f32.mrb[0].mxu0
        %v1068 = vadd.f32 0.0, %v1067
        %v1069 = vpop.f32.mrb[0].mxu0
        %v1070 = vpop.f32.mrb[0].mxu0
        %v1071 = vpop.f32.mrb[0].mxu0
        %1072 = vdwg.mxu0
        %v1074 = vsel %vm985, %v1023, 0
        %v1077 = vsel %vm1029, %v795, 0
        %1079 = vmatprep.subr.bf16.mxu0 0
        %1080 = vmatpush1.bf16.msra.mxu0 %v1077
        %1081 = vmatprep.subr.bf16.mxu0 0
        %1082 = vmatpush1.bf16.msra.mxu0 0
        %1083 = vmatprep.subr.bf16.mxu0 0
        %1084 = vmatpush1.bf16.msra.mxu0 0
        %1085 = vmatprep.subr.bf16.mxu0 0
        %1086 = vmatpush1.bf16.msra.mxu0 0
        %1087 = vmatprep.subr.bf16.mxu0 0
        %1088 = vmatpush1.bf16.msra.mxu0 0
        %1089 = vmatprep.subr.bf16.mxu0 0
        %1090 = vmatpush1.bf16.msra.mxu0 0
        %1091 = vmatprep.subr.bf16.mxu0 0
        %1092 = vmatpush1.bf16.msra.mxu0 0
        %1093 = vmatprep.subr.bf16.mxu0 0
        %1094 = vmatpush1.bf16.msra.mxu0 0
        %1095 = vmatprep.subr.bf16.mxu0 0
        %1096 = vmatpush1.bf16.msra.mxu0 0
        %1097 = vmatprep.subr.bf16.mxu0 0
        %1098 = vmatpush1.bf16.msra.mxu0 0
        %1099 = vmatprep.subr.bf16.mxu0 0
        %1100 = vmatpush1.bf16.msra.mxu0 0
        %1101 = vmatprep.subr.bf16.mxu0 0
        %1102 = vmatpush1.bf16.msra.mxu0 0
        %1103 = vmatprep.subr.bf16.mxu0 0
        %1104 = vmatpush1.bf16.msra.mxu0 0
        %1105 = vmatprep.subr.bf16.mxu0 0
        %1106 = vmatpush1.bf16.msra.mxu0 0
        %1107 = vmatprep.subr.bf16.mxu0 0
        %1108 = vmatpush1.bf16.msra.mxu0 0
        %1109 = vmatprep.subr.bf16.mxu0 0
        %1110 = vmatpush1.bf16.msra.mxu0 0
        %1111 = vmatprep.mubr.bf16.mxu0 0
        %1112 = vmatmul.mubr.bf16.gmra.mrb[0].mxu0 %v1074
        %v1113 = vpop.f32.mrb[0].mxu0
        %v1114 = vadd.f32 0.0, %v1113
        %v1115 = vpop.f32.mrb[0].mxu0
        %v1116 = vpop.f32.mrb[0].mxu0
        %v1117 = vpop.f32.mrb[0].mxu0
        %1118 = vdwg.mxu0
        %v1120 = vsel %vm985, %v1024, 0
        %v1123 = vsel %vm1029, %v797, 0
        %1125 = vmatprep.subr.bf16.mxu0 0
        %1126 = vmatpush1.bf16.msra.mxu0 %v1123
        %1127 = vmatprep.subr.bf16.mxu0 0
        %1128 = vmatpush1.bf16.msra.mxu0 0
        %1129 = vmatprep.subr.bf16.mxu0 0
        %1130 = vmatpush1.bf16.msra.mxu0 0
        %1131 = vmatprep.subr.bf16.mxu0 0
        %1132 = vmatpush1.bf16.msra.mxu0 0
        %1133 = vmatprep.subr.bf16.mxu0 0
        %1134 = vmatpush1.bf16.msra.mxu0 0
        %1135 = vmatprep.subr.bf16.mxu0 0
        %1136 = vmatpush1.bf16.msra.mxu0 0
        %1137 = vmatprep.subr.bf16.mxu0 0
        %1138 = vmatpush1.bf16.msra.mxu0 0
        %1139 = vmatprep.subr.bf16.mxu0 0
        %1140 = vmatpush1.bf16.msra.mxu0 0
        %1141 = vmatprep.subr.bf16.mxu0 0
        %1142 = vmatpush1.bf16.msra.mxu0 0
        %1143 = vmatprep.subr.bf16.mxu0 0
        %1144 = vmatpush1.bf16.msra.mxu0 0
        %1145 = vmatprep.subr.bf16.mxu0 0
        %1146 = vmatpush1.bf16.msra.mxu0 0
        %1147 = vmatprep.subr.bf16.mxu0 0
        %1148 = vmatpush1.bf16.msra.mxu0 0
        %1149 = vmatprep.subr.bf16.mxu0 0
        %1150 = vmatpush1.bf16.msra.mxu0 0
        %1151 = vmatprep.subr.bf16.mxu0 0
        %1152 = vmatpush1.bf16.msra.mxu0 0
        %1153 = vmatprep.subr.bf16.mxu0 0
        %1154 = vmatpush1.bf16.msra.mxu0 0
        %1155 = vmatprep.subr.bf16.mxu0 0
        %1156 = vmatpush1.bf16.msra.mxu0 0
        %1157 = vmatprep.mubr.bf16.mxu0 0
        %1158 = vmatmul.mubr.bf16.gmra.mrb[0].mxu0 %v1120
        %v1159 = vpop.f32.mrb[0].mxu0
        %v1160 = vadd.f32 0.0, %v1159
        %v1161 = vpop.f32.mrb[0].mxu0
        %v1162 = vpop.f32.mrb[0].mxu0
        %v1163 = vpop.f32.mrb[0].mxu0
        %1164 = vdwg.mxu0
        %v1166 = vsel %vm985, %v1025, 0
        %v1169 = vsel %vm1029, %v799, 0
        %1171 = vmatprep.subr.bf16.mxu0 0
        %1172 = vmatpush1.bf16.msra.mxu0 %v1169
        %1173 = vmatprep.subr.bf16.mxu0 0
        %1174 = vmatpush1.bf16.msra.mxu0 0
        %1175 = vmatprep.subr.bf16.mxu0 0
        %1176 = vmatpush1.bf16.msra.mxu0 0
        %1177 = vmatprep.subr.bf16.mxu0 0
        %1178 = vmatpush1.bf16.msra.mxu0 0
        %1179 = vmatprep.subr.bf16.mxu0 0
        %1180 = vmatpush1.bf16.msra.mxu0 0
        %1181 = vmatprep.subr.bf16.mxu0 0
        %1182 = vmatpush1.bf16.msra.mxu0 0
        %1183 = vmatprep.subr.bf16.mxu0 0
        %1184 = vmatpush1.bf16.msra.mxu0 0
        %1185 = vmatprep.subr.bf16.mxu0 0
        %1186 = vmatpush1.bf16.msra.mxu0 0
        %1187 = vmatprep.subr.bf16.mxu0 0
        %1188 = vmatpush1.bf16.msra.mxu0 0
        %1189 = vmatprep.subr.bf16.mxu0 0
        %1190 = vmatpush1.bf16.msra.mxu0 0
        %1191 = vmatprep.subr.bf16.mxu0 0
        %1192 = vmatpush1.bf16.msra.mxu0 0
        %1193 = vmatprep.subr.bf16.mxu0 0
        %1194 = vmatpush1.bf16.msra.mxu0 0
        %1195 = vmatprep.subr.bf16.mxu0 0
        %1196 = vmatpush1.bf16.msra.mxu0 0
        %1197 = vmatprep.subr.bf16.mxu0 0
        %1198 = vmatpush1.bf16.msra.mxu0 0
        %1199 = vmatprep.subr.bf16.mxu0 0
        %1200 = vmatpush1.bf16.msra.mxu0 0
        %1201 = vmatprep.subr.bf16.mxu0 0
        %1202 = vmatpush1.bf16.msra.mxu0 0
        %1203 = vmatprep.mubr.bf16.mxu0 0
        %1204 = vmatmul.mubr.bf16.gmra.mrb[0].mxu0 %v1166
        %v1205 = vpop.f32.mrb[0].mxu0
        %v1206 = vadd.f32 0.0, %v1205
        %v1207 = vpop.f32.mrb[0].mxu0
        %v1208 = vpop.f32.mrb[0].mxu0
        %v1209 = vpop.f32.mrb[0].mxu0
        %1210 = vdwg.mxu0
        %v1211 = vrcp.pop %v1012
        %v1212 = vrcp.pop %v1015
        %v1213 = vrcp.pop %v1018
        %v1214 = vrcp.pop %v1021
        %v1215 = vmul.f32 %v1068, %v1211
        %v1216 = vmul.f32 %v1114, %v1212
        %v1217 = vmul.f32 %v1160, %v1213
        %v1218 = vmul.f32 %v1206, %v1214
        %1220 = vrot.lane.b32.xlu0 %v1216, 32
        %v1221 = vpop.permute.xlu0 %1220
        %1224 = vrot.lane.b32.xlu0 %v1217, 64
        %v1225 = vpop.permute.xlu0 %1224
        %1228 = vrot.lane.b32.xlu0 %v1218, 96
        %v1229 = vpop.permute.xlu0 %1228
        %v1231 = vsel %vm800, %v1215, %v1221
        %vm1232 = vcmask 523264
        %v1233 = vsel %vm1232, %v1231, %v1225
        %vm1234 = vcmask 785408
        %v1235 = vsel %vm1234, %v1233, %v1229
        %v1236 = vpack.c.bf16 %v1235, %v1235
        %v1237 = vld [vmem:[#allocation7] sm:$0xf]
        %v1238 = vld [vmem:[#allocation7 + $0x4] sm:$0xf]
        %v1239 = vld [vmem:[#allocation7 + $0x8] sm:$0xf]
        %v1240 = vld [vmem:[#allocation7 + $0xc] sm:$0xf]
        %v1241 = vld [vmem:[#allocation7 + $0x10] sm:$0xf]
        %v1242 = vld [vmem:[#allocation7 + $0x14] sm:$0xf]
        %v1243 = vld [vmem:[#allocation7 + $0x18] sm:$0xf]
        %v1244 = vld [vmem:[#allocation7 + $0x1c] sm:$0xf]
        %v1245 = vld [vmem:[#allocation7 + $0x20] sm:$0xf]
        %v1246 = vld [vmem:[#allocation7 + $0x24] sm:$0xf]
        %v1247 = vld [vmem:[#allocation7 + $0x28] sm:$0xf]
        %v1248 = vld [vmem:[#allocation7 + $0x2c] sm:$0xf]
        %v1249 = vld [vmem:[#allocation7 + $0x30] sm:$0xf]
        %v1250 = vld [vmem:[#allocation7 + $0x34] sm:$0xf]
        %v1251 = vld [vmem:[#allocation7 + $0x38] sm:$0xf]
        %v1252 = vld [vmem:[#allocation7 + $0x3c] sm:$0xf]
        %v1253 = vld [vmem:[%s4] sm:$0x1]
        %v1255 = vlaneseq
        %v1256 = vshrl.u32 %v1255, 7
        %v1257 = vsub.s32 0, %v1256
        %v1258 = vrot.slane %v1253, %v1257
        %v1276 = vunpack.c.l.b16 %v1237
        %v1277 = vunpack.c.l.b16 %v1238
        %v1278 = vunpack.c.l.b16 %v1239
        %v1279 = vunpack.c.l.b16 %v1240
        %v1280 = vunpack.c.l.b16 %v1241
        %v1281 = vunpack.c.l.b16 %v1242
        %v1282 = vunpack.c.l.b16 %v1243
        %v1283 = vunpack.c.l.b16 %v1244
        %v1284 = vunpack.c.l.b16 %v1245
        %v1285 = vunpack.c.l.b16 %v1246
        %v1286 = vunpack.c.l.b16 %v1247
        %v1287 = vunpack.c.l.b16 %v1248
        %v1288 = vunpack.c.l.b16 %v1249
        %v1289 = vunpack.c.l.b16 %v1250
        %v1290 = vunpack.c.l.b16 %v1251
        %v1291 = vunpack.c.l.b16 %v1252
        %v1292 = vpack.c.b16 %v1277, %v1276
        %v1293 = vpack.c.b16 %v1279, %v1278
        %v1294 = vpack.c.b16 %v1281, %v1280
        %v1295 = vpack.c.b16 %v1283, %v1282
        %v1296 = vpack.c.b16 %v1285, %v1284
        %v1297 = vpack.c.b16 %v1287, %v1286
        %v1298 = vpack.c.b16 %v1289, %v1288
        %v1299 = vpack.c.b16 %v1291, %v1290
        %1308 = vmatprep.subr.bf16.mxu0 0
        %1309 = vmatpush1.bf16.msra.mxu0 %v1292
        %1310 = vmatprep.subr.bf16.mxu0 0
        %1311 = vmatpush1.bf16.msra.mxu0 %v1293
        %1312 = vmatprep.subr.bf16.mxu0 0
        %1313 = vmatpush1.bf16.msra.mxu0 %v1294
        %1314 = vmatprep.subr.bf16.mxu0 0
        %1315 = vmatpush1.bf16.msra.mxu0 %v1295
        %1316 = vmatprep.subr.bf16.mxu0 0
        %1317 = vmatpush1.bf16.msra.mxu0 %v1296
        %1318 = vmatprep.subr.bf16.mxu0 0
        %1319 = vmatpush1.bf16.msra.mxu0 %v1297
        %1320 = vmatprep.subr.bf16.mxu0 0
        %1321 = vmatpush1.bf16.msra.mxu0 %v1298
        %1322 = vmatprep.subr.bf16.mxu0 0
        %1323 = vmatpush1.bf16.msra.mxu0 %v1299
        %1324 = vmatprep.subr.bf16.mxu0 0
        %1325 = vmatpush1.bf16.msra.mxu0 0
        %1326 = vmatprep.subr.bf16.mxu0 0
        %1327 = vmatpush1.bf16.msra.mxu0 0
        %1328 = vmatprep.subr.bf16.mxu0 0
        %1329 = vmatpush1.bf16.msra.mxu0 0
        %1330 = vmatprep.subr.bf16.mxu0 0
        %1331 = vmatpush1.bf16.msra.mxu0 0
        %1332 = vmatprep.subr.bf16.mxu0 0
        %1333 = vmatpush1.bf16.msra.mxu0 0
        %1334 = vmatprep.subr.bf16.mxu0 0
        %1335 = vmatpush1.bf16.msra.mxu0 0
        %1336 = vmatprep.subr.bf16.mxu0 0
        %1337 = vmatpush1.bf16.msra.mxu0 0
        %1338 = vmatprep.subr.bf16.mxu0 0
        %1339 = vmatpush1.bf16.msra.mxu0 0
        %1340 = vmatprep.mubr.bf16.mxu0 0
        %1341 = vmatmul.mubr.bf16.gmra.mrb[0].mxu0 %v1236
        %v1342 = vpop.f32.mrb[0].mxu0
        %v1343 = vadd.f32 %v1258, %v1342
        %v1344 = vpop.f32.mrb[0].mxu0
        %v1345 = vpop.f32.mrb[0].mxu0
        %v1346 = vpop.f32.mrb[0].mxu0
        %1347 = vdwg.mxu0
        %v1348 = vadd.f32 %v1343, %v516
        %v1349 = vld [vmem:[%s5] sm:$0x1]
        %v1350 = vld [vmem:[%s6] sm:$0x1]
        %1351 = vadd.xlane.f32.xlu0 %v1348
        %v1352 = vpop.xlane.xlu0 %1351
        %v1353 = vrcp.pop 128.0
        %v1354 = vmul.f32 %v1352, %v1353
        %v1355 = vsub.f32 %v1348, %v1354
        %v1356 = vmul.f32 %v1355, %v1355
        %1357 = vadd.xlane.f32.xlu0 %v1356
        %v1358 = vpop.xlane.xlu0 %1357
        %v1359 = vmul.f32 %v1358, %v1353
        %v1360 = vadd.f32 %v1359, 1e-05
        %v1361 = vrsqrt.pop %v1360
        %v1362 = vmul.f32 %v1355, %v1361
        %v1364 = vlaneseq
        %v1365 = vshrl.u32 %v1364, 7
        %v1366 = vsub.s32 0, %v1365
        %v1367 = vrot.slane %v1349, %v1366
        %v1369 = vmul.f32 %v1362, %v1367
        %v1371 = vlaneseq
        %v1372 = vshrl.u32 %v1371, 7
        %v1373 = vsub.s32 0, %v1372
        %v1374 = vrot.slane %v1350, %v1373
        %v1376 = vadd.f32 %v1369, %v1374
        %v1377 = vpack.c.bf16 %v1376, %v1376
        %v1378 = vld [vmem:[#allocation8] sm:$0xff]
        %v1379 = vld [vmem:[#allocation8 + $0x8] sm:$0xff]
        %v1380 = vld [vmem:[#allocation8 + $0x10] sm:$0xff]
        %v1381 = vld [vmem:[#allocation8 + $0x18] sm:$0xff]
        %v1382 = vld [vmem:[#allocation8 + $0x20] sm:$0xff]
        %v1383 = vld [vmem:[#allocation8 + $0x28] sm:$0xff]
        %v1384 = vld [vmem:[#allocation8 + $0x30] sm:$0xff]
        %v1385 = vld [vmem:[#allocation8 + $0x38] sm:$0xff]
        %v1386 = vld [vmem:[#allocation8 + $0x40] sm:$0xff]
        %v1387 = vld [vmem:[#allocation8 + $0x48] sm:$0xff]
        %v1388 = vld [vmem:[#allocation8 + $0x50] sm:$0xff]
        %v1389 = vld [vmem:[#allocation8 + $0x58] sm:$0xff]
        %v1390 = vld [vmem:[#allocation8 + $0x60] sm:$0xff]
        %v1391 = vld [vmem:[#allocation8 + $0x68] sm:$0xff]
        %v1392 = vld [vmem:[#allocation8 + $0x70] sm:$0xff]
        %v1393 = vld [vmem:[#allocation8 + $0x78] sm:$0xff]
        %v1394 = vld [vmem:[%s8] sm:$0x3]
        %v1396 = vlaneseq
        %v1397 = vshrl.u32 %v1396, 7
        %v1398 = vsub.s32 0, %v1397
        %v1399 = vrot.slane %v1394, %v1398
        %v1400 = vlaneseq
        %v1401 = vshrl.u32 %v1400, 7
        %v1402 = vsub.s32 1, %v1401
        %v1403 = vrot.slane %v1394, %v1402
        %v1422 = vunpack.c.l.b16 %v1378
        %v1423 = vunpack.c.h.b16 %v1378
        %v1424 = vunpack.c.l.b16 %v1379
        %v1425 = vunpack.c.h.b16 %v1379
        %v1426 = vunpack.c.l.b16 %v1380
        %v1427 = vunpack.c.h.b16 %v1380
        %v1428 = vunpack.c.l.b16 %v1381
        %v1429 = vunpack.c.h.b16 %v1381
        %v1430 = vunpack.c.l.b16 %v1382
        %v1431 = vunpack.c.h.b16 %v1382
        %v1432 = vunpack.c.l.b16 %v1383
        %v1433 = vunpack.c.h.b16 %v1383
        %v1434 = vunpack.c.l.b16 %v1384
        %v1435 = vunpack.c.h.b16 %v1384
        %v1436 = vunpack.c.l.b16 %v1385
        %v1437 = vunpack.c.h.b16 %v1385
        %v1438 = vunpack.c.l.b16 %v1386
        %v1439 = vunpack.c.h.b16 %v1386
        %v1440 = vunpack.c.l.b16 %v1387
        %v1441 = vunpack.c.h.b16 %v1387
        %v1442 = vunpack.c.l.b16 %v1388
        %v1443 = vunpack.c.h.b16 %v1388
        %v1444 = vunpack.c.l.b16 %v1389
        %v1445 = vunpack.c.h.b16 %v1389
        %v1446 = vunpack.c.l.b16 %v1390
        %v1447 = vunpack.c.h.b16 %v1390
        %v1448 = vunpack.c.l.b16 %v1391
        %v1449 = vunpack.c.h.b16 %v1391
        %v1450 = vunpack.c.l.b16 %v1392
        %v1451 = vunpack.c.h.b16 %v1392
        %v1452 = vunpack.c.l.b16 %v1393
        %v1453 = vunpack.c.h.b16 %v1393
        %v1454 = vpack.c.b16 %v1424, %v1422
        %v1455 = vpack.c.b16 %v1425, %v1423
        %v1456 = vpack.c.b16 %v1428, %v1426
        %v1457 = vpack.c.b16 %v1429, %v1427
        %v1458 = vpack.c.b16 %v1432, %v1430
        %v1459 = vpack.c.b16 %v1433, %v1431
        %v1460 = vpack.c.b16 %v1436, %v1434
        %v1461 = vpack.c.b16 %v1437, %v1435
        %v1462 = vpack.c.b16 %v1440, %v1438
        %v1463 = vpack.c.b16 %v1441, %v1439
        %v1464 = vpack.c.b16 %v1444, %v1442
        %v1465 = vpack.c.b16 %v1445, %v1443
        %v1466 = vpack.c.b16 %v1448, %v1446
        %v1467 = vpack.c.b16 %v1449, %v1447
        %v1468 = vpack.c.b16 %v1452, %v1450
        %v1469 = vpack.c.b16 %v1453, %v1451
        %1486 = vmatprep.subr.bf16.mxu0 %v1455
        %1487 = vmatpush1.bf16.msra.mxu0 %v1454
        %1488 = vmatprep.subr.bf16.mxu0 %v1457
        %1489 = vmatpush1.bf16.msra.mxu0 %v1456
        %1490 = vmatprep.subr.bf16.mxu0 %v1459
        %1491 = vmatpush1.bf16.msra.mxu0 %v1458
        %1492 = vmatprep.subr.bf16.mxu0 %v1461
        %1493 = vmatpush1.bf16.msra.mxu0 %v1460
        %1494 = vmatprep.subr.bf16.mxu0 %v1463
        %1495 = vmatpush1.bf16.msra.mxu0 %v1462
        %1496 = vmatprep.subr.bf16.mxu0 %v1465
        %1497 = vmatpush1.bf16.msra.mxu0 %v1464
        %1498 = vmatprep.subr.bf16.mxu0 %v1467
        %1499 = vmatpush1.bf16.msra.mxu0 %v1466
        %1500 = vmatprep.subr.bf16.mxu0 %v1469
        %1501 = vmatpush1.bf16.msra.mxu0 %v1468
        %1502 = vmatprep.subr.bf16.mxu0 0
        %1503 = vmatpush1.bf16.msra.mxu0 0
        %1504 = vmatprep.subr.bf16.mxu0 0
        %1505 = vmatpush1.bf16.msra.mxu0 0
        %1506 = vmatprep.subr.bf16.mxu0 0
        %1507 = vmatpush1.bf16.msra.mxu0 0
        %1508 = vmatprep.subr.bf16.mxu0 0
        %1509 = vmatpush1.bf16.msra.mxu0 0
        %1510 = vmatprep.subr.bf16.mxu0 0
        %1511 = vmatpush1.bf16.msra.mxu0 0
        %1512 = vmatprep.subr.bf16.mxu0 0
        %1513 = vmatpush1.bf16.msra.mxu0 0
        %1514 = vmatprep.subr.bf16.mxu0 0
        %1515 = vmatpush1.bf16.msra.mxu0 0
        %1516 = vmatprep.subr.bf16.mxu0 0
        %1517 = vmatpush1.bf16.msra.mxu0 0
        %1518 = vmatprep.mubr.bf16.mxu0 0
        %1519 = vmatmul.mubr.bf16.gmra.mrb[0].mxu0 %v1377
        %v1520 = vpop.f32.mrb[0].mxu0
        %v1521 = vadd.f32 %v1399, %v1520
        %v1522 = vpop.f32.mrb[0].mxu0
        %v1523 = vadd.f32 %v1403, %v1522
        %v1524 = vpop.f32.mrb[0].mxu0
        %v1525 = vpop.f32.mrb[0].mxu0
        %1526 = vdwg.mxu0
        %v1527 = vmax.f32 %v1521, 0.0
        %v1528 = vmax.f32 %v1523, 0.0
        %v1529 = vpack.c.bf16 %v1527, %v1527
        %v1530 = vpack.c.bf16 %v1528, %v1528
        %v1531 = vld [vmem:[#allocation10] sm:$0xf]
        %v1532 = vld [vmem:[#allocation10 + $0x4] sm:$0xf]
        %v1533 = vld [vmem:[#allocation10 + $0x8] sm:$0xf]
        %v1534 = vld [vmem:[#allocation10 + $0xc] sm:$0xf]
        %v1535 = vld [vmem:[#allocation10 + $0x10] sm:$0xf]
        %v1536 = vld [vmem:[#allocation10 + $0x14] sm:$0xf]
        %v1537 = vld [vmem:[#allocation10 + $0x18] sm:$0xf]
        %v1538 = vld [vmem:[#allocation10 + $0x1c] sm:$0xf]
        %v1539 = vld [vmem:[#allocation10 + $0x20] sm:$0xf]
        %v1540 = vld [vmem:[#allocation10 + $0x24] sm:$0xf]
        %v1541 = vld [vmem:[#allocation10 + $0x28] sm:$0xf]
        %v1542 = vld [vmem:[#allocation10 + $0x2c] sm:$0xf]
        %v1543 = vld [vmem:[#allocation10 + $0x30] sm:$0xf]
        %v1544 = vld [vmem:[#allocation10 + $0x34] sm:$0xf]
        %v1545 = vld [vmem:[#allocation10 + $0x38] sm:$0xf]
        %v1546 = vld [vmem:[#allocation10 + $0x3c] sm:$0xf]
        %v1547 = vld [vmem:[#allocation10 + $0x40] sm:$0xf]
        %v1548 = vld [vmem:[#allocation10 + $0x44] sm:$0xf]
        %v1549 = vld [vmem:[#allocation10 + $0x48] sm:$0xf]
        %v1550 = vld [vmem:[#allocation10 + $0x4c] sm:$0xf]
        %v1551 = vld [vmem:[#allocation10 + $0x50] sm:$0xf]
        %v1552 = vld [vmem:[#allocation10 + $0x54] sm:$0xf]
        %v1553 = vld [vmem:[#allocation10 + $0x58] sm:$0xf]
        %v1554 = vld [vmem:[#allocation10 + $0x5c] sm:$0xf]
        %v1555 = vld [vmem:[#allocation10 + $0x60] sm:$0xf]
        %v1556 = vld [vmem:[#allocation10 + $0x64] sm:$0xf]
        %v1557 = vld [vmem:[#allocation10 + $0x68] sm:$0xf]
        %v1558 = vld [vmem:[#allocation10 + $0x6c] sm:$0xf]
        %v1559 = vld [vmem:[#allocation10 + $0x70] sm:$0xf]
        %v1560 = vld [vmem:[#allocation10 + $0x74] sm:$0xf]
        %v1561 = vld [vmem:[#allocation10 + $0x78] sm:$0xf]
        %v1562 = vld [vmem:[#allocation10 + $0x7c] sm:$0xf]
        %v1563 = vld [vmem:[%s10] sm:$0x1]
        %v1565 = vlaneseq
        %v1566 = vshrl.u32 %v1565, 7
        %v1567 = vsub.s32 0, %v1566
        %v1568 = vrot.slane %v1563, %v1567
        %v1602 = vunpack.c.l.b16 %v1531
        %v1603 = vunpack.c.l.b16 %v1532
        %v1604 = vunpack.c.l.b16 %v1533
        %v1605 = vunpack.c.l.b16 %v1534
        %v1606 = vunpack.c.l.b16 %v1535
        %v1607 = vunpack.c.l.b16 %v1536
        %v1608 = vunpack.c.l.b16 %v1537
        %v1609 = vunpack.c.l.b16 %v1538
        %v1610 = vunpack.c.l.b16 %v1539
        %v1611 = vunpack.c.l.b16 %v1540
        %v1612 = vunpack.c.l.b16 %v1541
        %v1613 = vunpack.c.l.b16 %v1542
        %v1614 = vunpack.c.l.b16 %v1543
        %v1615 = vunpack.c.l.b16 %v1544
        %v1616 = vunpack.c.l.b16 %v1545
        %v1617 = vunpack.c.l.b16 %v1546
        %v1618 = vunpack.c.l.b16 %v1547
        %v1619 = vunpack.c.l.b16 %v1548
        %v1620 = vunpack.c.l.b16 %v1549
        %v1621 = vunpack.c.l.b16 %v1550
        %v1622 = vunpack.c.l.b16 %v1551
        %v1623 = vunpack.c.l.b16 %v1552
        %v1624 = vunpack.c.l.b16 %v1553
        %v1625 = vunpack.c.l.b16 %v1554
        %v1626 = vunpack.c.l.b16 %v1555
        %v1627 = vunpack.c.l.b16 %v1556
        %v1628 = vunpack.c.l.b16 %v1557
        %v1629 = vunpack.c.l.b16 %v1558
        %v1630 = vunpack.c.l.b16 %v1559
        %v1631 = vunpack.c.l.b16 %v1560
        %v1632 = vunpack.c.l.b16 %v1561
        %v1633 = vunpack.c.l.b16 %v1562
        %v1634 = vpack.c.b16 %v1603, %v1602
        %v1635 = vpack.c.b16 %v1605, %v1604
        %v1636 = vpack.c.b16 %v1607, %v1606
        %v1637 = vpack.c.b16 %v1609, %v1608
        %v1638 = vpack.c.b16 %v1611, %v1610
        %v1639 = vpack.c.b16 %v1613, %v1612
        %v1640 = vpack.c.b16 %v1615, %v1614
        %v1641 = vpack.c.b16 %v1617, %v1616
        %v1642 = vpack.c.b16 %v1619, %v1618
        %v1643 = vpack.c.b16 %v1621, %v1620
        %v1644 = vpack.c.b16 %v1623, %v1622
        %v1645 = vpack.c.b16 %v1625, %v1624
        %v1646 = vpack.c.b16 %v1627, %v1626
        %v1647 = vpack.c.b16 %v1629, %v1628
        %v1648 = vpack.c.b16 %v1631, %v1630
        %v1649 = vpack.c.b16 %v1633, %v1632
        %1666 = vmatprep.subr.bf16.mxu0 0
        %1667 = vmatpush1.bf16.msra.mxu0 %v1634
        %1668 = vmatprep.subr.bf16.mxu0 0
        %1669 = vmatpush1.bf16.msra.mxu0 %v1635
        %1670 = vmatprep.subr.bf16.mxu0 0
        %1671 = vmatpush1.bf16.msra.mxu0 %v1636
        %1672 = vmatprep.subr.bf16.mxu0 0
        %1673 = vmatpush1.bf16.msra.mxu0 %v1637
        %1674 = vmatprep.subr.bf16.mxu0 0
        %1675 = vmatpush1.bf16.msra.mxu0 %v1638
        %1676 = vmatprep.subr.bf16.mxu0 0
        %1677 = vmatpush1.bf16.msra.mxu0 %v1639
        %1678 = vmatprep.subr.bf16.mxu0 0
        %1679 = vmatpush1.bf16.msra.mxu0 %v1640
        %1680 = vmatprep.subr.bf16.mxu0 0
        %1681 = vmatpush1.bf16.msra.mxu0 %v1641
        %1682 = vmatprep.subr.bf16.mxu0 0
        %1683 = vmatpush1.bf16.msra.mxu0 %v1642
        %1684 = vmatprep.subr.bf16.mxu0 0
        %1685 = vmatpush1.bf16.msra.mxu0 %v1643
        %1686 = vmatprep.subr.bf16.mxu0 0
        %1687 = vmatpush1.bf16.msra.mxu0 %v1644
        %1688 = vmatprep.subr.bf16.mxu0 0
        %1689 = vmatpush1.bf16.msra.mxu0 %v1645
        %1690 = vmatprep.subr.bf16.mxu0 0
        %1691 = vmatpush1.bf16.msra.mxu0 %v1646
        %1692 = vmatprep.subr.bf16.mxu0 0
        %1693 = vmatpush1.bf16.msra.mxu0 %v1647
        %1694 = vmatprep.subr.bf16.mxu0 0
        %1695 = vmatpush1.bf16.msra.mxu0 %v1648
        %1696 = vmatprep.subr.bf16.mxu0 0
        %1697 = vmatpush1.bf16.msra.mxu0 %v1649
        %1698 = vmatprep.mubr.bf16.mxu0 %v1530
        %1699 = vmatmul.mubr.bf16.gmra.mrb[0].mxu0 %v1529
        %v1700 = vpop.f32.mrb[0].mxu0
        %v1701 = vadd.f32 %v1568, %v1700
        %v1702 = vpop.f32.mrb[0].mxu0
        %v1703 = vpop.f32.mrb[0].mxu0
        %v1704 = vpop.f32.mrb[0].mxu0
        %1705 = vdwg.mxu0
        %v1706 = vadd.f32 %v1701, %v1376
        %v1707 = vld [vmem:[%s11] sm:$0x1]
        %v1708 = vld [vmem:[%s12] sm:$0x1]
        %1709 = vadd.xlane.f32.xlu0 %v1706
        %v1710 = vpop.xlane.xlu0 %1709
        %v1711 = vmul.f32 %v1710, %v1353
        %v1712 = vsub.f32 %v1706, %v1711
        %v1713 = vmul.f32 %v1712, %v1712
        %1714 = vadd.xlane.f32.xlu0 %v1713
        %v1715 = vpop.xlane.xlu0 %1714
        %v1716 = vmul.f32 %v1715, %v1353
        %v1717 = vadd.f32 %v1716, 1e-05
        %v1718 = vrsqrt.pop %v1717
        %v1719 = vmul.f32 %v1712, %v1718
        %v1721 = vlaneseq
        %v1722 = vshrl.u32 %v1721, 7
        %v1723 = vsub.s32 0, %v1722
        %v1724 = vrot.slane %v1707, %v1723
        %v1726 = vmul.f32 %v1719, %v1724
        %v1728 = vlaneseq
        %v1729 = vshrl.u32 %v1728, 7
        %v1730 = vsub.s32 0, %v1729
        %v1731 = vrot.slane %v1708, %v1730
        %v1733 = vadd.f32 %v1726, %v1731
        %v1734 = vpack.c.bf16 %v1733, %v1733
        %1735 = vst [vmem:[%s513] sm:$0xf] %v1734
        %s1736 = sand.u32 %s318, 1
        %s1737 = scalar_lea.sflag [#allocation4], %s1736
        %s1738 = sand.u32 %s318, 1
        %s1739 = smul.addr %s1738, 4
        %s1740 = scalar_lea.vmem [#allocation11], %s1739
        // Predicated region
        $region93: #{tpu_custom_call.1} parent=71 // pred_check
          %p1741 = pneg %p328
        $region94: #{tpu_custom_call.1} parent=71 // pred_check_branch
          %1743 = sbr.rel (%p1741) target = $region96
        $region95: #{tpu_custom_call.1} parent=71 // pred_region
          %s1745 = ssub.s32 64, 64
          %1746 = vsyncadd %s1737, %s1745
          %s1747 = smul.addr %s32, 64
          %s1748 = scalar_lea.hbm %s13, %s1747
          %s1750 = sshll.u32 %s1740, 4
          %s1751 = int_to_ptr.vmem [resolvable:$true] %s1750
          %1753 = dma.vmem_to_hbm [thread:$0]  %s1751, 64, %s1748, %s1737
        $region96: #{tpu_custom_call.1} parent=71 // pred_fallthru
          _
      $region72: #{tpu_custom_call.1} parent=5 // pred_fallthru
        _
      %p1754 = scmp.le.s32.totalorder 2, %s27
      // Predicated region
      $region97: #{tpu_custom_call.1} parent=5 // pred_check
        %p1755 = pneg %p1754
      $region98: #{tpu_custom_call.1} parent=5 // pred_check_branch
        %1757 = sbr.rel (%p1755) target = $region100
      $region99: #{tpu_custom_call.1} parent=5 // pred_region
        %s1758 = ssub.s32 %s27, 2
        // Predicated region
        $region101: #{tpu_custom_call.1} parent=99 // pred_check
          %p1759 = pneg %p334
        $region102: #{tpu_custom_call.1} parent=99 // pred_check_branch
          %1761 = sbr.rel (%p1759) target = $region104
        $region103: #{tpu_custom_call.1} parent=99 // pred_region
          %s1762 = sand.u32 %s319, 1
          %s1763 = scalar_lea.sflag [#allocation4], %s1762
          %s1764 = sand.u32 %s319, 1
          %s1765 = smul.addr %s1764, 4
          %s1766 = scalar_lea.vmem [#allocation11], %s1765
          %1767 = dma.done %s1763, 64
        $region104: #{tpu_custom_call.1} parent=99 // pred_fallthru
          _
      $region100: #{tpu_custom_call.1} parent=5 // pred_fallthru
        _
    $region6: #{tpu_custom_call.1} parent=1 // loop_footer
      %s31 = sadd.s32 1, %s27
    $region7: #{tpu_custom_call.1} parent=1 // loop_footer_branch
      %26 = sbr.rel target = $region3
    $region8: #{tpu_custom_call.1} parent=1 // loop_exit
      _
    %1768 = vsyncpa [#allocation3], 1
    %s1769 = scalar_lea.sflag [#allocation3], 1
    %1770 = vsyncpa %s1769, 1
    %1771 = vsyncpa [#allocation6], 1
    %1772 = vsyncpa [#allocation9], 1
    %1773 = vsyncpa [#allocation4], 1
    %s1774 = scalar_lea.sflag [#allocation4], 1
    %1775 = vsyncpa %s1774, 1

</llo_original>
